<compile_context>
chip_gen: v5e
topology: v5e:2x2
jax: 0.10.0
libtpu: 0.0.40
codegen_flags: <defaults>
</compile_context>

<pallas_src>
import functools

import numpy as np
import jax
import jax.numpy as jnp
from jax.experimental import pallas as pl
from jax.experimental.pallas import tpu as pltpu


def embedding_net_kernel(
    ids_ref,                      # (3, tb) int32 — rows: item, category, shop ids
    tcatf_ref,                    # (20, Ni+Nc+Ns) fused (BN0 + fc1) table, feature-major
    b1f_ref,                      # (20, 1)
    w2f_ref, b2f_ref,             # (10, 20) (10, 1)  fused (BN1 + fc2), feature-major
    wout_col_ref, bout_ref,       # (10, 1)  (1, 1)   fused (BN2 + out)
    out_ref,                      # (1, tb)  lane-dense output
    *, n_items, n_cats,
):
    tb = ids_ref.shape[1]
    ntot = tcatf_ref.shape[1]

    # Combined one-hot over the concatenated vocab (item | category | shop).
    # The three id ranges are disjoint after the static offsets, so each batch
    # column carries exactly three ones and a SINGLE MXU pass computes
    #   z1[:, b] = T'[:, i_item] + T'[:, Ni + i_cat] + T'[:, Ni+Nc + i_shop] + b1'.
    iota = jax.lax.broadcasted_iota(jnp.int32, (ntot, tb), 0)          # (Ntot, tb)
    oh = (
        (iota == ids_ref[0:1, :])
        | (iota == ids_ref[1:2, :] + n_items)
        | (iota == ids_ref[2:3, :] + (n_items + n_cats))
    ).astype(jnp.float32)                                              # (Ntot, tb)

    # fc1 (embedding gather + bn0 + fc1 fused) + relu — dropout0 identity (eval)
    z1 = jnp.dot(tcatf_ref[...], oh, preferred_element_type=jnp.float32) + b1f_ref[...]
    a1 = jnp.maximum(z1, 0.0)                                          # (20, tb)

    # fc2 (bn1 folded) + relu — dropout1 identity (eval)
    z2 = jnp.dot(w2f_ref[...], a1, preferred_element_type=jnp.float32) + b2f_ref[...]
    a2 = jnp.maximum(z2, 0.0)                                          # (10, tb)

    # out layer (bn2 folded) — dropout2 identity (eval)
    # K=10, N=1: VPU multiply + sublane reduce instead of a tiny MXU dot.
    out_ref[...] = jnp.sum(wout_col_ref[...] * a2, axis=0, keepdims=True) + bout_ref[...]


def _pick_tb(batch, tb_max=2048):
    """Lane-dense batch tile: multiple of 128, <= tb_max, and (when the batch
    allows) small enough to give >= 2 grid steps so 'parallel' can shard the
    grid across v7x's two TensorCores. On v5e/v6e (1 TC) this only affects
    per-step overhead amortization."""
    tb = tb_max
    while tb > 128 and (batch + tb - 1) // tb < 2:
        tb //= 2
    return tb


def embedding_net_forward(ids, P, *, tb=None):
    """ids: (3, B) int32 [preferred: item/category/shop rows, no transpose needed]
    or (B, 3) int32 columns. Returns (B,) float32 predictions (eval-mode forward)."""
    if ids.ndim != 2:
        raise ValueError("ids must be 2-D")
    if ids.shape[0] == 3:                                  # preferred layout: (3, B)
        ids_t = ids.astype(jnp.int32)
    elif ids.shape[1] == 3:
        ids_t = jnp.transpose(ids).astype(jnp.int32)       # legacy (B, 3) layout
    else:
        raise ValueError("ids must be shaped (3, B) or (B, 3)")

    B = ids_t.shape[1]
    if tb is None:
        tb = _pick_tb(B)
    B_pad = ((B + tb - 1) // tb) * tb
    if B_pad != B:
        ids_t = jnp.pad(ids_t, ((0, 0), (0, B_pad - B)))   # pad cols use id 0 (valid rows)

    kernel = functools.partial(
        embedding_net_kernel, n_items=int(P["n_items"]), n_cats=int(P["n_cats"])
    )

    params = [P["tcatf"], P["b1f"], P["w2f"], P["b2f"], P["wout_col"], P["boutf"]]

    def resident(a):
        # fully resident across the grid (all params are small 2-D arrays)
        return pl.BlockSpec(a.shape, lambda i: (0, 0))

    # TODO(synk): if xprof ever shows exposed DMA on the ids stream (per-step
    # compute is only ~1-2 us), deepen its pipeline with
    # pipeline_mode=pl.Buffered(3) on this BlockSpec — the tile is only 3*tb*4 B.
    in_specs = [pl.BlockSpec((3, tb), lambda i: (0, i))] + [resident(a) for a in params]

    out = pl.pallas_call(
        kernel,
        out_shape=jax.ShapeDtypeStruct((1, B_pad), jnp.float32),
        grid=(B_pad // tb,),
        in_specs=in_specs,
        out_specs=pl.BlockSpec((1, tb), lambda i: (0, i)),
        compiler_params=pltpu.CompilerParams(dimension_semantics=("parallel",)),
    )(ids_t, *params)

    return out[0, :B]   # torch .squeeze() on (B, 1) -> (B,)


def make_params(key, n_items, n_cats, n_shops):
    e_items, e_cats, e_shops = 24, 8, 8
    d_in = e_items + e_cats + e_shops          # 40
    d_h1 = int(np.ceil(d_in / 2))              # 20
    d_h2 = int(np.ceil(d_in / 4))              # 10
    eps = 1e-5

    ks = jax.random.split(key, 9)

    def linear(kw, kb, fan_in, fan_out):
        bound = 1.0 / np.sqrt(fan_in)
        w = jax.random.uniform(kw, (fan_in, fan_out), jnp.float32, -bound, bound)
        b = jax.random.uniform(kb, (1, fan_out), jnp.float32, -bound, bound)
        return w, b

    item_tab = jax.random.normal(ks[0], (n_items, e_items), jnp.float32)
    cat_tab = jax.random.normal(ks[1], (n_cats, e_cats), jnp.float32)
    shop_tab = jax.random.normal(ks[2], (n_shops, e_shops), jnp.float32)

    w1, b1 = linear(ks[3], ks[4], d_in, d_h1)
    w2, b2 = linear(ks[5], ks[6], d_h1, d_h2)
    wout, bout = linear(ks[7], ks[8], d_h2, 1)

    def bn_fold(num_features):
        gamma = jnp.ones((1, num_features), jnp.float32)   # PyTorch BN defaults
        beta = jnp.zeros((1, num_features), jnp.float32)
        running_mean = jnp.zeros((1, num_features), jnp.float32)
        running_var = jnp.ones((1, num_features), jnp.float32)
        scale = gamma / jnp.sqrt(running_var + eps)
        shift = beta - running_mean * scale
        return scale, shift

    s0, h0 = bn_fold(d_in)
    s1, h1 = bn_fold(d_h1)
    s2, h2 = bn_fold(d_h2)

    # ---- fold BN0 + fc1 into the embedding tables and concatenate (kernel-facing) ----
    w1a = w1[:e_items]
    w1b = w1[e_items:e_items + e_cats]
    w1c = w1[e_items + e_cats:]
    t1f = jnp.transpose((item_tab * s0[:, :e_items]) @ w1a)                    # (20, Ni)
    t2f = jnp.transpose((cat_tab * s0[:, e_items:e_items + e_cats]) @ w1b)     # (20, Nc)
    t3f = jnp.transpose((shop_tab * s0[:, e_items + e_cats:]) @ w1c)           # (20, Ns)
    tcatf = jnp.concatenate([t1f, t2f, t3f], axis=1)                           # (20, Ni+Nc+Ns)
    b1f = jnp.transpose(b1 + h0 @ w1)                                          # (20, 1)

    # ---- fold BN1 into fc2 ----
    w2f = jnp.transpose(w2 * s1.T)                                             # (10, 20)
    b2f = jnp.transpose(b2 + h1 @ w2)                                          # (10, 1)

    # ---- fold BN2 into the out layer (kept as a (10,1) column for the VPU reduce) ----
    wout_col = wout * s2.T                                                     # (10, 1)
    boutf = bout + h2 @ wout                                                   # (1, 1)

    P = dict(
        # kernel-facing folded params
        tcatf=tcatf, b1f=b1f, w2f=w2f, b2f=b2f, wout_col=wout_col, boutf=boutf,
        n_items=int(n_items), n_cats=int(n_cats), n_shops=int(n_shops),
        # raw params for the pure-JAX reference
        item_tab=item_tab, cat_tab=cat_tab, shop_tab=shop_tab,
        w1=w1, b1=b1, w2=w2, b2=b2, wout=wout, bout=bout,
        bn0_scale=s0, bn0_shift=h0,
        bn1_scale=s1, bn1_shift=h1,
        bn2_scale=s2, bn2_shift=h2,
    )
    return P


def reference_forward(ids_3b, P):
    # Unfused, eval-mode reference (matches the torch module's forward in eval()).
    t1 = P["item_tab"][ids_3b[0]]
    t2 = P["cat_tab"][ids_3b[1]]
    t3 = P["shop_tab"][ids_3b[2]]
    x = jnp.concatenate([t1, t2, t3], axis=1)
    x = x * P["bn0_scale"] + P["bn0_shift"]
    x = jnp.maximum(x @ P["w1"] + P["b1"], 0.0)
    x = x * P["bn1_scale"] + P["bn1_shift"]
    x = jnp.maximum(x @ P["w2"] + P["b2"], 0.0)
    x = x * P["bn2_scale"] + P["bn2_shift"]
    x = x @ P["wout"] + P["bout"]
    return x.squeeze(-1)


if __name__ == "__main__":
    key = jax.random.PRNGKey(0)
    k_ids, k_params = jax.random.split(key)

    n_items, n_cats, n_shops = 32, 16, 12
    B = 2048     # auto tile -> tb=1024, grid=2: amortized overhead + even grid for v7x's 2 TCs

    # ids built directly in the preferred (3, B) layout: no wrapper transpose.
    ids = jnp.stack(
        [
            jax.random.randint(jax.random.fold_in(k_ids, 0), (B,), 0, n_items),
            jax.random.randint(jax.random.fold_in(k_ids, 1), (B,), 0, n_cats),
            jax.random.randint(jax.random.fold_in(k_ids, 2), (B,), 0, n_shops),
        ],
        axis=0,
    ).astype(jnp.int32)

    P = make_params(k_params, n_items, n_cats, n_shops)

    out = embedding_net_forward(ids, P)
    out = jax.block_until_ready(out)

    ref = reference_forward(ids, P)
    np.testing.assert_allclose(np.asarray(out), np.asarray(ref), rtol=1e-4, atol=1e-4)

    print("KERNEL_OK")
</pallas_src>

<mosaic_0001>
module attributes {stable_mosaic.version = 11 : i64} {
  func.func @embedding_net_kernel(%arg0: i32, %arg1: memref<3x1024xi32, #tpu.memory_space<vmem>>, %arg2: memref<20x60xf32, #tpu.memory_space<vmem>>, %arg3: memref<20x1xf32, #tpu.memory_space<vmem>>, %arg4: memref<10x20xf32, #tpu.memory_space<vmem>>, %arg5: memref<10x1xf32, #tpu.memory_space<vmem>>, %arg6: memref<10x1xf32, #tpu.memory_space<vmem>>, %arg7: memref<1x1xf32, #tpu.memory_space<vmem>>, %arg8: memref<1x1024xf32, #tpu.memory_space<vmem>>) attributes {dimension_semantics = [#tpu.dimension_semantics<parallel>], iteration_bounds = array<i64: 2>, scalar_prefetch = 0 : i64, scratch_operands = 0 : i64, tpu.core_type = #tpu.core_type<tc>, window_params = [{transform_indices = @transform_0, window_bounds = array<i64: 3, 1024>}, {pipeline_mode = #tpu.pipeline_mode<synchronous>, transform_indices = @transform_1, window_bounds = array<i64: 20, 60>}, {pipeline_mode = #tpu.pipeline_mode<synchronous>, transform_indices = @transform_2, window_bounds = array<i64: 20, 1>}, {pipeline_mode = #tpu.pipeline_mode<synchronous>, transform_indices = @transform_3, window_bounds = array<i64: 10, 20>}, {pipeline_mode = #tpu.pipeline_mode<synchronous>, transform_indices = @transform_4, window_bounds = array<i64: 10, 1>}, {pipeline_mode = #tpu.pipeline_mode<synchronous>, transform_indices = @transform_5, window_bounds = array<i64: 10, 1>}, {pipeline_mode = #tpu.pipeline_mode<synchronous>, transform_indices = @transform_6, window_bounds = array<i64: 1, 1>}, {transform_indices = @transform_7, window_bounds = array<i64: 1, 1024>}]} {
    %0 = tpu.iota {dimensions = array<i32: 0>} : vector<60x1024xi32>
    %c0 = arith.constant 0 : index
    %c0_0 = arith.constant 0 : index
    %1 = vector.load %arg1[%c0, %c0_0] : memref<3x1024xi32, #tpu.memory_space<vmem>>, vector<1x1024xi32>
    %2 = vector.broadcast %1 : vector<1x1024xi32> to vector<60x1024xi32>
    %3 = arith.cmpi eq, %0, %2 : vector<60x1024xi32>
    %c1 = arith.constant 1 : index
    %c0_1 = arith.constant 0 : index
    %4 = vector.load %arg1[%c1, %c0_1] : memref<3x1024xi32, #tpu.memory_space<vmem>>, vector<1x1024xi32>
    %c32_i32 = arith.constant 32 : i32
    %5 = vector.broadcast %c32_i32 : i32 to vector<1x1024xi32>
    %6 = arith.addi %4, %5 : vector<1x1024xi32>
    %7 = vector.broadcast %6 : vector<1x1024xi32> to vector<60x1024xi32>
    %8 = arith.cmpi eq, %0, %7 : vector<60x1024xi32>
    %9 = arith.ori %3, %8 : vector<60x1024xi1>
    %c2 = arith.constant 2 : index
    %c0_2 = arith.constant 0 : index
    %10 = vector.load %arg1[%c2, %c0_2] : memref<3x1024xi32, #tpu.memory_space<vmem>>, vector<1x1024xi32>
    %c48_i32 = arith.constant 48 : i32
    %11 = vector.broadcast %c48_i32 : i32 to vector<1x1024xi32>
    %12 = arith.addi %10, %11 : vector<1x1024xi32>
    %13 = vector.broadcast %12 : vector<1x1024xi32> to vector<60x1024xi32>
    %14 = arith.cmpi eq, %0, %13 : vector<60x1024xi32>
    %15 = arith.ori %9, %14 : vector<60x1024xi1>
    %16 = arith.extui %15 : vector<60x1024xi1> to vector<60x1024xi32>
    %17 = arith.sitofp %16 : vector<60x1024xi32> to vector<60x1024xf32>
    %c0_3 = arith.constant 0 : index
    %c0_4 = arith.constant 0 : index
    %18 = vector.load %arg2[%c0_3, %c0_4] : memref<20x60xf32, #tpu.memory_space<vmem>>, vector<20x60xf32>
    %cst = arith.constant dense<0.000000e+00> : vector<20x1024xf32>
    %19 = tpu.matmul %18, %17, %cst {dimension_numbers = #tpu.dot_dimension_numbers<[1], [0], [0], [1], [0, 0, 1, 1], [], []>} : vector<20x60xf32>, vector<60x1024xf32>, vector<20x1024xf32> -> vector<20x1024xf32>
    %c0_5 = arith.constant 0 : index
    %c0_6 = arith.constant 0 : index
    %20 = vector.load %arg3[%c0_5, %c0_6] : memref<20x1xf32, #tpu.memory_space<vmem>>, vector<20x1xf32>
    %21 = vector.broadcast %20 : vector<20x1xf32> to vector<20x1024xf32>
    %22 = arith.addf %19, %21 : vector<20x1024xf32>
    %cst_7 = arith.constant 0.000000e+00 : f32
    %23 = vector.broadcast %cst_7 : f32 to vector<20x1024xf32>
    %24 = arith.maximumf %22, %23 : vector<20x1024xf32>
    %c0_8 = arith.constant 0 : index
    %c0_9 = arith.constant 0 : index
    %25 = vector.load %arg4[%c0_8, %c0_9] : memref<10x20xf32, #tpu.memory_space<vmem>>, vector<10x20xf32>
    %cst_10 = arith.constant dense<0.000000e+00> : vector<10x1024xf32>
    %26 = tpu.matmul %25, %24, %cst_10 {dimension_numbers = #tpu.dot_dimension_numbers<[1], [0], [0], [1], [0, 0, 1, 1], [], []>} : vector<10x20xf32>, vector<20x1024xf32>, vector<10x1024xf32> -> vector<10x1024xf32>
    %c0_11 = arith.constant 0 : index
    %c0_12 = arith.constant 0 : index
    %27 = vector.load %arg5[%c0_11, %c0_12] : memref<10x1xf32, #tpu.memory_space<vmem>>, vector<10x1xf32>
    %28 = vector.broadcast %27 : vector<10x1xf32> to vector<10x1024xf32>
    %29 = arith.addf %26, %28 : vector<10x1024xf32>
    %cst_13 = arith.constant 0.000000e+00 : f32
    %30 = vector.broadcast %cst_13 : f32 to vector<10x1024xf32>
    %31 = arith.maximumf %29, %30 : vector<10x1024xf32>
    %c0_14 = arith.constant 0 : index
    %c0_15 = arith.constant 0 : index
    %32 = vector.load %arg6[%c0_14, %c0_15] : memref<10x1xf32, #tpu.memory_space<vmem>>, vector<10x1xf32>
    %33 = vector.broadcast %32 : vector<10x1xf32> to vector<10x1024xf32>
    %34 = arith.mulf %33, %31 : vector<10x1024xf32>
    %cst_16 = arith.constant dense<0.000000e+00> : vector<1024xf32>
    %35 = vector.multi_reduction <add>, %34, %cst_16 [0] : vector<10x1024xf32> to vector<1024xf32>
    %36 = vector.shape_cast %35 : vector<1024xf32> to vector<1x1024xf32>
    %c0_17 = arith.constant 0 : index
    %c0_18 = arith.constant 0 : index
    %37 = vector.load %arg7[%c0_17, %c0_18] : memref<1x1xf32, #tpu.memory_space<vmem>>, vector<1x1xf32>
    %38 = vector.broadcast %37 : vector<1x1xf32> to vector<1x1024xf32>
    %39 = arith.addf %36, %38 : vector<1x1024xf32>
    %c0_19 = arith.constant 0 : index
    %c0_20 = arith.constant 0 : index
    %40 = vector.load %arg8[%c0_19, %c0_20] : memref<1x1024xf32, #tpu.memory_space<vmem>>, vector<1x1024xf32>
    tpu.vector_store %arg8[%c0_19, %c0_20], %39 {strides = array<i32>} : memref<1x1024xf32, #tpu.memory_space<vmem>>, vector<1x1024xf32>,
    return
  }
  func.func @transform_0(%arg0: i32) -> (i32, i32) {
    %c0_i32 = arith.constant 0 : i32
    %c0_i32_0 = arith.constant 0 : i32
    return %c0_i32, %arg0 : i32, i32
  }
  func.func @transform_1(%arg0: i32) -> (i32, i32) {
    %c0_i32 = arith.constant 0 : i32
    %c0_i32_0 = arith.constant 0 : i32
    %c0_i32_1 = arith.constant 0 : i32
    return %c0_i32, %c0_i32_0 : i32, i32
  }
  func.func @transform_2(%arg0: i32) -> (i32, i32) {
    %c0_i32 = arith.constant 0 : i32
    %c0_i32_0 = arith.constant 0 : i32
    %c0_i32_1 = arith.constant 0 : i32
    return %c0_i32, %c0_i32_0 : i32, i32
  }
  func.func @transform_3(%arg0: i32) -> (i32, i32) {
    %c0_i32 = arith.constant 0 : i32
    %c0_i32_0 = arith.constant 0 : i32
    %c0_i32_1 = arith.constant 0 : i32
    return %c0_i32, %c0_i32_0 : i32, i32
  }
  func.func @transform_4(%arg0: i32) -> (i32, i32) {
    %c0_i32 = arith.constant 0 : i32
    %c0_i32_0 = arith.constant 0 : i32
    %c0_i32_1 = arith.constant 0 : i32
    return %c0_i32, %c0_i32_0 : i32, i32
  }
  func.func @transform_5(%arg0: i32) -> (i32, i32) {
    %c0_i32 = arith.constant 0 : i32
    %c0_i32_0 = arith.constant 0 : i32
    %c0_i32_1 = arith.constant 0 : i32
    return %c0_i32, %c0_i32_0 : i32, i32
  }
  func.func @transform_6(%arg0: i32) -> (i32, i32) {
    %c0_i32 = arith.constant 0 : i32
    %c0_i32_0 = arith.constant 0 : i32
    %c0_i32_1 = arith.constant 0 : i32
    return %c0_i32, %c0_i32_0 : i32, i32
  }
  func.func @transform_7(%arg0: i32) -> (i32, i32) {
    %c0_i32 = arith.constant 0 : i32
    %c0_i32_0 = arith.constant 0 : i32
    return %c0_i32, %arg0 : i32, i32
  }
}

</mosaic_0001>

<llo_original>
// kernel: tpu_custom_call.1
$region0: #{tpu_custom_call.1}
  #allocation0 [shape = 'u32[]', space=smem, size = 0x4, offset = 0x4, fixed_abs, tag = 'smem constant byte address 0x4 - core index']
  #allocation1 [shape = 'u32[72,128]{1,0:T(1,128)}', space=vmem, size = 0x9000, scoped, tag = 'internal scratch']
  #allocation2 [shape = 'f32[1,1]{1,0:T(1,128)S(1)}', space=vmem, size = 0x200, scoped, tag = 'scoped memory for tpu_custom_call.1']
  %s0 = inlined_call_operand.hbm [shape: s32[3,2048], index: 0, kind: input, shape index: {}]
  %s1 = inlined_call_operand.vmem [shape: f32[20,60], index: 1, kind: input, shape index: {}]
  %s2 = inlined_call_operand.vmem [shape: f32[20,1], index: 2, kind: input, shape index: {}]
  %s3 = inlined_call_operand.vmem [shape: f32[10,20], index: 3, kind: input, shape index: {}]
  %s4 = inlined_call_operand.vmem [shape: f32[10,1], index: 4, kind: input, shape index: {}]
  %s5 = inlined_call_operand.vmem [shape: f32[10,1], index: 5, kind: input, shape index: {}]
  %s6 = inlined_call_operand.<no memory space> [shape: f32[1,1], index: 6, kind: input, shape index: {}]
  %s7 = inlined_call_operand.hbm [shape: f32[1,2048], index: 7, kind: output, shape index: {}]
  %s8 = sld [smem:[#allocation0]]
  $region65: #{tpu_custom_call.1} parent=0
    _
  %s10 = ssub.s32 1, %s8
  %s11 = scalar_select 0, %s10, %s8
  %v12 = vstv %s6
  %13 = vst [vmem:[#allocation2] sm:$0x1] %v12
  $region1: #{tpu_custom_call.1} parent=0
    #allocation3 [shape = 'u8[32768]{0}', space=vmem, size = 0x8000, scoped, tag = 'input window, operand 0']
    #allocation4 [shape = 's32[2]{0}', space=sflag, size = 0x8, scoped, tag = 'scoped memory for tpu_custom_call.1']
    #allocation5 [shape = 's32[2]{0}', space=sflag, size = 0x8, scoped, tag = 'scoped memory for tpu_custom_call.1']
    #allocation6 [shape = 'u8[8192]{0}', space=vmem, size = 0x2000, scoped, tag = 'output window, operand 0']
    %14 = vsyncpa [#allocation4], 0
    %s15 = scalar_lea.sflag [#allocation4], 1
    %16 = vsyncpa %s15, 0
    %17 = vsyncpa [#allocation5], 0
    %s18 = scalar_lea.sflag [#allocation5], 1
    %19 = vsyncpa %s18, 0
    loop: start=0, step=1, limit=4
    $region2: #{tpu_custom_call.1} parent=1 // loop_pre_header
      _
    $region3: #{tpu_custom_call.1} parent=1 // loop_header
      %s21 = sphi 0, %s25
      %p22 = scmp.ge.s32.totalorder %s21, 4
      %s31 = sphi 0, %s33
      %s34 = sphi 0, %s31
      %s35 = sphi 0, %s34
      %s51 = sphi 0, %s35
      %s55 = sphi 0, %s55
      %s57 = sphi 0, %s55
      %s58 = sphi 0, %s57
      %s72 = sphi 0, %s58
      %s76 = sphi 0, %s76
      %s78 = sphi 0, %s76
      %s79 = sphi 0, %s78
      %s93 = sphi 0, %s79
      %s97 = sphi 0, %s97
      %s99 = sphi 0, %s97
      %s100 = sphi 0, %s99
      %s114 = sphi 0, %s100
      %s118 = sphi 0, %s118
      %s120 = sphi 0, %s118
      %s121 = sphi 0, %s120
      %s135 = sphi 0, %s121
      %s139 = sphi 0, %s139
      %s141 = sphi 0, %s139
      %s142 = sphi 0, %s141
      %s156 = sphi 0, %s142
      %s160 = sphi 0, %s160
      %s162 = sphi 0, %s160
      %s163 = sphi 0, %s162
      %s177 = sphi 0, %s163
      %s183 = sphi 0, %s185
      %s186 = sphi 0, %s183
      %s187 = sphi 0, %s186
      %s203 = sphi 0, %s187
    $region4: #{tpu_custom_call.1} parent=1 // loop_header_branch
      %24 = sbr.rel (%p22) target = $region8
    $region5: #{tpu_custom_call.1} parent=1 // loop_body
      %s26 = ssub.s32 %s21, 1
      %s27 = ssub.s32 %s21, 2
      %s28 = sadd.s32 %s21, 1
      %s29 = ssub.s32 %s21, %s28
      %p30 = scmp.eq.s32.totalorder %s29, 0
      %s32 = sadd.s32 %s31, 1
      %s33 = scalar_select %p30, %s31, %s32
      %p36 = pneg %p30
      %p37 = scmp.eq.s32.totalorder %s21, 1
      %p38 = por %p36, %p37
      %p39 = scmp.ne.s32.totalorder %s31, %s34
      %p40 = scmp.eq.s32.totalorder %s21, 0
      %p41 = por %p39, %p40
      %p42 = scmp.ne.s32.totalorder %s31, %s34
      %p43 = scmp.eq.s32.totalorder %s26, 1
      %p44 = por %p42, %p43
      %p45 = scmp.ne.s32.totalorder %s34, %s35
      %p46 = scmp.eq.s32.totalorder %s26, 0
      %p47 = por %p45, %p46
      %p48 = scmp.ne.s32.totalorder %s34, %s35
      %p49 = scmp.eq.s32.totalorder %s27, 1
      %p50 = por %p48, %p49
      %p52 = scmp.ne.s32.totalorder %s35, %s51
      %p53 = scmp.eq.s32.totalorder %s27, 0
      %p54 = por %p52, %p53
      %s56 = sadd.s32 %s55, 1
      %p59 = scmp.eq.s32.totalorder %s21, 1
      %p60 = scmp.ne.s32.totalorder %s55, %s57
      %p61 = scmp.eq.s32.totalorder %s21, 0
      %p62 = por %p60, %p61
      %p63 = scmp.ne.s32.totalorder %s55, %s57
      %p64 = scmp.eq.s32.totalorder %s26, 1
      %p65 = por %p63, %p64
      %p66 = scmp.ne.s32.totalorder %s57, %s58
      %p67 = scmp.eq.s32.totalorder %s26, 0
      %p68 = por %p66, %p67
      %p69 = scmp.ne.s32.totalorder %s57, %s58
      %p70 = scmp.eq.s32.totalorder %s27, 1
      %p71 = por %p69, %p70
      %p73 = scmp.ne.s32.totalorder %s58, %s72
      %p74 = scmp.eq.s32.totalorder %s27, 0
      %p75 = por %p73, %p74
      %s77 = sadd.s32 %s76, 1
      %p80 = scmp.eq.s32.totalorder %s21, 1
      %p81 = scmp.ne.s32.totalorder %s76, %s78
      %p82 = scmp.eq.s32.totalorder %s21, 0
      %p83 = por %p81, %p82
      %p84 = scmp.ne.s32.totalorder %s76, %s78
      %p85 = scmp.eq.s32.totalorder %s26, 1
      %p86 = por %p84, %p85
      %p87 = scmp.ne.s32.totalorder %s78, %s79
      %p88 = scmp.eq.s32.totalorder %s26, 0
      %p89 = por %p87, %p88
      %p90 = scmp.ne.s32.totalorder %s78, %s79
      %p91 = scmp.eq.s32.totalorder %s27, 1
      %p92 = por %p90, %p91
      %p94 = scmp.ne.s32.totalorder %s79, %s93
      %p95 = scmp.eq.s32.totalorder %s27, 0
      %p96 = por %p94, %p95
      %s98 = sadd.s32 %s97, 1
      %p101 = scmp.eq.s32.totalorder %s21, 1
      %p102 = scmp.ne.s32.totalorder %s97, %s99
      %p103 = scmp.eq.s32.totalorder %s21, 0
      %p104 = por %p102, %p103
      %p105 = scmp.ne.s32.totalorder %s97, %s99
      %p106 = scmp.eq.s32.totalorder %s26, 1
      %p107 = por %p105, %p106
      %p108 = scmp.ne.s32.totalorder %s99, %s100
      %p109 = scmp.eq.s32.totalorder %s26, 0
      %p110 = por %p108, %p109
      %p111 = scmp.ne.s32.totalorder %s99, %s100
      %p112 = scmp.eq.s32.totalorder %s27, 1
      %p113 = por %p111, %p112
      %p115 = scmp.ne.s32.totalorder %s100, %s114
      %p116 = scmp.eq.s32.totalorder %s27, 0
      %p117 = por %p115, %p116
      %s119 = sadd.s32 %s118, 1
      %p122 = scmp.eq.s32.totalorder %s21, 1
      %p123 = scmp.ne.s32.totalorder %s118, %s120
      %p124 = scmp.eq.s32.totalorder %s21, 0
      %p125 = por %p123, %p124
      %p126 = scmp.ne.s32.totalorder %s118, %s120
      %p127 = scmp.eq.s32.totalorder %s26, 1
      %p128 = por %p126, %p127
      %p129 = scmp.ne.s32.totalorder %s120, %s121
      %p130 = scmp.eq.s32.totalorder %s26, 0
      %p131 = por %p129, %p130
      %p132 = scmp.ne.s32.totalorder %s120, %s121
      %p133 = scmp.eq.s32.totalorder %s27, 1
      %p134 = por %p132, %p133
      %p136 = scmp.ne.s32.totalorder %s121, %s135
      %p137 = scmp.eq.s32.totalorder %s27, 0
      %p138 = por %p136, %p137
      %s140 = sadd.s32 %s139, 1
      %p143 = scmp.eq.s32.totalorder %s21, 1
      %p144 = scmp.ne.s32.totalorder %s139, %s141
      %p145 = scmp.eq.s32.totalorder %s21, 0
      %p146 = por %p144, %p145
      %p147 = scmp.ne.s32.totalorder %s139, %s141
      %p148 = scmp.eq.s32.totalorder %s26, 1
      %p149 = por %p147, %p148
      %p150 = scmp.ne.s32.totalorder %s141, %s142
      %p151 = scmp.eq.s32.totalorder %s26, 0
      %p152 = por %p150, %p151
      %p153 = scmp.ne.s32.totalorder %s141, %s142
      %p154 = scmp.eq.s32.totalorder %s27, 1
      %p155 = por %p153, %p154
      %p157 = scmp.ne.s32.totalorder %s142, %s156
      %p158 = scmp.eq.s32.totalorder %s27, 0
      %p159 = por %p157, %p158
      %s161 = sadd.s32 %s160, 1
      %p164 = scmp.eq.s32.totalorder %s21, 1
      %p165 = scmp.ne.s32.totalorder %s160, %s162
      %p166 = scmp.eq.s32.totalorder %s21, 0
      %p167 = por %p165, %p166
      %p168 = scmp.ne.s32.totalorder %s160, %s162
      %p169 = scmp.eq.s32.totalorder %s26, 1
      %p170 = por %p168, %p169
      %p171 = scmp.ne.s32.totalorder %s162, %s163
      %p172 = scmp.eq.s32.totalorder %s26, 0
      %p173 = por %p171, %p172
      %p174 = scmp.ne.s32.totalorder %s162, %s163
      %p175 = scmp.eq.s32.totalorder %s27, 1
      %p176 = por %p174, %p175
      %p178 = scmp.ne.s32.totalorder %s163, %s177
      %p179 = scmp.eq.s32.totalorder %s27, 0
      %p180 = por %p178, %p179
      %s181 = ssub.s32 %s21, %s28
      %p182 = scmp.eq.s32.totalorder %s181, 0
      %s184 = sadd.s32 %s183, 1
      %s185 = scalar_select %p182, %s183, %s184
      %p188 = pneg %p182
      %p189 = scmp.eq.s32.totalorder %s21, 1
      %p190 = por %p188, %p189
      %p191 = scmp.ne.s32.totalorder %s183, %s186
      %p192 = scmp.eq.s32.totalorder %s21, 0
      %p193 = por %p191, %p192
      %p194 = scmp.ne.s32.totalorder %s183, %s186
      %p195 = scmp.eq.s32.totalorder %s26, 1
      %p196 = por %p194, %p195
      %p197 = scmp.ne.s32.totalorder %s186, %s187
      %p198 = scmp.eq.s32.totalorder %s26, 0
      %p199 = por %p197, %p198
      %p200 = scmp.ne.s32.totalorder %s186, %s187
      %p201 = scmp.eq.s32.totalorder %s27, 1
      %p202 = por %p200, %p201
      %p204 = scmp.ne.s32.totalorder %s187, %s203
      %p205 = scmp.eq.s32.totalorder %s27, 0
      %p206 = por %p204, %p205
      %p207 = scmp.le.s32.totalorder 1, %s21
      %p208 = scmp.lt.s32.totalorder %s21, 3
      %p209 = pnand %p207, %p208
      %p210 = pneg %p209
      // Predicated region
      $region9: #{tpu_custom_call.1} parent=5 // pred_check
        _
      $region10: #{tpu_custom_call.1} parent=5 // pred_check_branch
        %212 = sbr.rel (%p209) target = $region12
      $region11: #{tpu_custom_call.1} parent=5 // pred_region
        %s213 = ssub.s32 %s21, 1
        // Predicated region
        $region13: #{tpu_custom_call.1} parent=11 // pred_check
          %p214 = pneg %p68
        $region14: #{tpu_custom_call.1} parent=11 // pred_check_branch
          %216 = sbr.rel (%p214) target = $region16
        $region15: #{tpu_custom_call.1} parent=11 // pred_region
          _
        $region16: #{tpu_custom_call.1} parent=11 // pred_fallthru
          _
        // Predicated region
        $region17: #{tpu_custom_call.1} parent=11 // pred_check
          %p217 = pneg %p89
        $region18: #{tpu_custom_call.1} parent=11 // pred_check_branch
          %219 = sbr.rel (%p217) target = $region20
        $region19: #{tpu_custom_call.1} parent=11 // pred_region
          _
        $region20: #{tpu_custom_call.1} parent=11 // pred_fallthru
          _
        // Predicated region
        $region21: #{tpu_custom_call.1} parent=11 // pred_check
          %p220 = pneg %p110
        $region22: #{tpu_custom_call.1} parent=11 // pred_check_branch
          %222 = sbr.rel (%p220) target = $region24
        $region23: #{tpu_custom_call.1} parent=11 // pred_region
          _
        $region24: #{tpu_custom_call.1} parent=11 // pred_fallthru
          _
        // Predicated region
        $region25: #{tpu_custom_call.1} parent=11 // pred_check
          %p223 = pneg %p131
        $region26: #{tpu_custom_call.1} parent=11 // pred_check_branch
          %225 = sbr.rel (%p223) target = $region28
        $region27: #{tpu_custom_call.1} parent=11 // pred_region
          _
        $region28: #{tpu_custom_call.1} parent=11 // pred_fallthru
          _
        // Predicated region
        $region29: #{tpu_custom_call.1} parent=11 // pred_check
          %p226 = pneg %p152
        $region30: #{tpu_custom_call.1} parent=11 // pred_check_branch
          %228 = sbr.rel (%p226) target = $region32
        $region31: #{tpu_custom_call.1} parent=11 // pred_region
          _
        $region32: #{tpu_custom_call.1} parent=11 // pred_fallthru
          _
        // Predicated region
        $region33: #{tpu_custom_call.1} parent=11 // pred_check
          %p229 = pneg %p173
        $region34: #{tpu_custom_call.1} parent=11 // pred_check_branch
          %231 = sbr.rel (%p229) target = $region36
        $region35: #{tpu_custom_call.1} parent=11 // pred_region
          _
        $region36: #{tpu_custom_call.1} parent=11 // pred_fallthru
          _
      $region12: #{tpu_custom_call.1} parent=5 // pred_fallthru
        _
      %p232 = scmp.lt.s32.totalorder %s21, 2
      // Predicated region
      $region37: #{tpu_custom_call.1} parent=5 // pred_check
        %p233 = pneg %p232
      $region38: #{tpu_custom_call.1} parent=5 // pred_check_branch
        %235 = sbr.rel (%p233) target = $region40
      $region39: #{tpu_custom_call.1} parent=5 // pred_region
        // Predicated region
        $region41: #{tpu_custom_call.1} parent=39 // pred_check
          %p236 = pneg %p41
        $region42: #{tpu_custom_call.1} parent=39 // pred_check_branch
          %238 = sbr.rel (%p236) target = $region44
        $region43: #{tpu_custom_call.1} parent=39 // pred_region
          %s239 = sand.u32 %s31, 1
          %s240 = scalar_lea.sflag [#allocation4], %s239
          %s241 = sand.u32 %s31, 1
          %s242 = smul.addr %s241, 32
          %s243 = scalar_lea.vmem [#allocation3], %s242
          %s244 = smul.u32 8, %s21
          %246 = vsyncadd %s240, 0
          %s247 = smul.addr %s244, 4
          %s248 = scalar_lea.hbm %s0, %s247
          %s250 = sshll.u32 %s248, 4
          %s251 = int_to_ptr.hbm [resolvable:$true] %s250
          %s252 = sshll.u32 %s243, 4
          %s253 = int_to_ptr.vmem [resolvable:$true] %s252
          %255 = dma.hbm_to_vmem [thread:$0]  %s251, 512, %s253, %s240
        $region44: #{tpu_custom_call.1} parent=39 // pred_fallthru
          _
      $region40: #{tpu_custom_call.1} parent=5 // pred_fallthru
        _
      %p256 = scmp.le.s32.totalorder 1, %s21
      %p257 = scmp.lt.s32.totalorder %s21, 3
      %p258 = pnand %p256, %p257
      %p259 = pneg %p258
      // Predicated region
      $region45: #{tpu_custom_call.1} parent=5 // pred_check
        _
      $region46: #{tpu_custom_call.1} parent=5 // pred_check_branch
        %261 = sbr.rel (%p258) target = $region48
      $region47: #{tpu_custom_call.1} parent=5 // pred_region
        %s262 = ssub.s32 %s21, 1
        %s263 = sand.u32 %s34, 1
        %s264 = scalar_lea.sflag [#allocation4], %s263
        %s265 = sand.u32 %s34, 1
        %s266 = smul.addr %s265, 32
        %s267 = scalar_lea.vmem [#allocation3], %s266
        // Predicated region
        $region49: #{tpu_custom_call.1} parent=47 // pred_check
          %p268 = pneg %p47
        $region50: #{tpu_custom_call.1} parent=47 // pred_check_branch
          %270 = sbr.rel (%p268) target = $region52
        $region51: #{tpu_custom_call.1} parent=47 // pred_region
          %272 = dma.done %s264, 512
        $region52: #{tpu_custom_call.1} parent=47 // pred_fallthru
          _
        %s273 = sand.u32 %s34, 1
        %s274 = scalar_lea.sflag [#allocation4], %s273
        %s275 = sand.u32 %s34, 1
        %s276 = smul.addr %s275, 32
        %s277 = scalar_lea.vmem [#allocation3], %s276
        %p278 = pneg %p47
        %p279 = pneg %p44
        %p280 = pneg %p68
        %p281 = pneg %p65
        %p282 = pneg %p89
        %p283 = pneg %p86
        %p284 = pneg %p110
        %p285 = pneg %p107
        %p286 = pneg %p131
        %p287 = pneg %p128
        %p288 = pneg %p152
        %p289 = pneg %p149
        %p290 = pneg %p173
        %p291 = pneg %p170
        %p292 = pneg %p199
        %p293 = pneg %p196
        %s294 = sand.u32 %s186, 1
        %s295 = scalar_lea.sflag [#allocation5], %s294
        %s296 = sand.u32 %s186, 1
        %s297 = smul.addr %s296, 8
        %s298 = scalar_lea.vmem [#allocation6], %s297
        %s299 = smul.u32 8, %s26
        %s300 = smul.u32 8, %s26
        %v301 = vlaneseq
        %v302 = vshrl.u32 %v301, 7
        %v303 = vadd.s32 %v302, 8
        %v304 = vadd.s32 %v302, 16
        %v305 = vadd.s32 %v302, 24
        %v306 = vadd.s32 %v302, 32
        %v307 = vadd.s32 %v302, 40
        %v308 = vadd.s32 %v302, 48
        %v309 = vadd.s32 %v302, 56
        %v310 = vld [vmem:[%s267] ss:$4 sm:$0xff]
        %v311 = vperm.slane %v310, 0
        %v312 = vperm.slane %v310, 1
        %v313 = vperm.slane %v310, 2
        %v314 = vperm.slane %v310, 3
        %v315 = vperm.slane %v310, 4
        %v316 = vperm.slane %v310, 5
        %v317 = vperm.slane %v310, 6
        %v318 = vperm.slane %v310, 7
        %vm319 = vcmp.eq.s32.totalorder %v302, %v311
        %vm320 = vcmp.eq.s32.totalorder %v302, %v312
        %vm321 = vcmp.eq.s32.totalorder %v302, %v313
        %vm322 = vcmp.eq.s32.totalorder %v302, %v314
        %vm323 = vcmp.eq.s32.totalorder %v302, %v315
        %vm324 = vcmp.eq.s32.totalorder %v302, %v316
        %vm325 = vcmp.eq.s32.totalorder %v302, %v317
        %vm326 = vcmp.eq.s32.totalorder %v302, %v318
        %vm327 = vcmp.eq.s32.totalorder %v303, %v311
        %vm328 = vcmp.eq.s32.totalorder %v303, %v312
        %vm329 = vcmp.eq.s32.totalorder %v303, %v313
        %vm330 = vcmp.eq.s32.totalorder %v303, %v314
        %vm331 = vcmp.eq.s32.totalorder %v303, %v315
        %vm332 = vcmp.eq.s32.totalorder %v303, %v316
        %vm333 = vcmp.eq.s32.totalorder %v303, %v317
        %vm334 = vcmp.eq.s32.totalorder %v303, %v318
        %vm335 = vcmp.eq.s32.totalorder %v304, %v311
        %vm336 = vcmp.eq.s32.totalorder %v304, %v312
        %vm337 = vcmp.eq.s32.totalorder %v304, %v313
        %vm338 = vcmp.eq.s32.totalorder %v304, %v314
        %vm339 = vcmp.eq.s32.totalorder %v304, %v315
        %vm340 = vcmp.eq.s32.totalorder %v304, %v316
        %vm341 = vcmp.eq.s32.totalorder %v304, %v317
        %vm342 = vcmp.eq.s32.totalorder %v304, %v318
        %vm343 = vcmp.eq.s32.totalorder %v305, %v311
        %vm344 = vcmp.eq.s32.totalorder %v305, %v312
        %vm345 = vcmp.eq.s32.totalorder %v305, %v313
        %vm346 = vcmp.eq.s32.totalorder %v305, %v314
        %vm347 = vcmp.eq.s32.totalorder %v305, %v315
        %vm348 = vcmp.eq.s32.totalorder %v305, %v316
        %vm349 = vcmp.eq.s32.totalorder %v305, %v317
        %vm350 = vcmp.eq.s32.totalorder %v305, %v318
        %vm351 = vcmp.eq.s32.totalorder %v306, %v311
        %vm352 = vcmp.eq.s32.totalorder %v306, %v312
        %vm353 = vcmp.eq.s32.totalorder %v306, %v313
        %vm354 = vcmp.eq.s32.totalorder %v306, %v314
        %vm355 = vcmp.eq.s32.totalorder %v306, %v315
        %vm356 = vcmp.eq.s32.totalorder %v306, %v316
        %vm357 = vcmp.eq.s32.totalorder %v306, %v317
        %vm358 = vcmp.eq.s32.totalorder %v306, %v318
        %vm359 = vcmp.eq.s32.totalorder %v307, %v311
        %vm360 = vcmp.eq.s32.totalorder %v307, %v312
        %vm361 = vcmp.eq.s32.totalorder %v307, %v313
        %vm362 = vcmp.eq.s32.totalorder %v307, %v314
        %vm363 = vcmp.eq.s32.totalorder %v307, %v315
        %vm364 = vcmp.eq.s32.totalorder %v307, %v316
        %vm365 = vcmp.eq.s32.totalorder %v307, %v317
        %vm366 = vcmp.eq.s32.totalorder %v307, %v318
        %vm367 = vcmp.eq.s32.totalorder %v308, %v311
        %vm368 = vcmp.eq.s32.totalorder %v308, %v312
        %vm369 = vcmp.eq.s32.totalorder %v308, %v313
        %vm370 = vcmp.eq.s32.totalorder %v308, %v314
        %vm371 = vcmp.eq.s32.totalorder %v308, %v315
        %vm372 = vcmp.eq.s32.totalorder %v308, %v316
        %vm373 = vcmp.eq.s32.totalorder %v308, %v317
        %vm374 = vcmp.eq.s32.totalorder %v308, %v318
        %vm375 = vcmp.eq.s32.totalorder %v309, %v311
        %vm376 = vcmp.eq.s32.totalorder %v309, %v312
        %vm377 = vcmp.eq.s32.totalorder %v309, %v313
        %vm378 = vcmp.eq.s32.totalorder %v309, %v314
        %vm379 = vcmp.eq.s32.totalorder %v309, %v315
        %vm380 = vcmp.eq.s32.totalorder %v309, %v316
        %vm381 = vcmp.eq.s32.totalorder %v309, %v317
        %vm382 = vcmp.eq.s32.totalorder %v309, %v318
        %s383 = scalar_lea.vmem %s267, 1 [#allocation3]
        %v384 = vld [vmem:[%s383] ss:$4 sm:$0xff]
        %v385 = vadd.s32 %v384, 32
        %v386 = vperm.slane %v385, 0
        %v387 = vperm.slane %v385, 1
        %v388 = vperm.slane %v385, 2
        %v389 = vperm.slane %v385, 3
        %v390 = vperm.slane %v385, 4
        %v391 = vperm.slane %v385, 5
        %v392 = vperm.slane %v385, 6
        %v393 = vperm.slane %v385, 7
        %vm394 = vcmp.eq.s32.totalorder %v302, %v386
        %vm395 = vcmp.eq.s32.totalorder %v302, %v387
        %vm396 = vcmp.eq.s32.totalorder %v302, %v388
        %vm397 = vcmp.eq.s32.totalorder %v302, %v389
        %vm398 = vcmp.eq.s32.totalorder %v302, %v390
        %vm399 = vcmp.eq.s32.totalorder %v302, %v391
        %vm400 = vcmp.eq.s32.totalorder %v302, %v392
        %vm401 = vcmp.eq.s32.totalorder %v302, %v393
        %vm402 = vcmp.eq.s32.totalorder %v303, %v386
        %vm403 = vcmp.eq.s32.totalorder %v303, %v387
        %vm404 = vcmp.eq.s32.totalorder %v303, %v388
        %vm405 = vcmp.eq.s32.totalorder %v303, %v389
        %vm406 = vcmp.eq.s32.totalorder %v303, %v390
        %vm407 = vcmp.eq.s32.totalorder %v303, %v391
        %vm408 = vcmp.eq.s32.totalorder %v303, %v392
        %vm409 = vcmp.eq.s32.totalorder %v303, %v393
        %vm410 = vcmp.eq.s32.totalorder %v304, %v386
        %vm411 = vcmp.eq.s32.totalorder %v304, %v387
        %vm412 = vcmp.eq.s32.totalorder %v304, %v388
        %vm413 = vcmp.eq.s32.totalorder %v304, %v389
        %vm414 = vcmp.eq.s32.totalorder %v304, %v390
        %vm415 = vcmp.eq.s32.totalorder %v304, %v391
        %vm416 = vcmp.eq.s32.totalorder %v304, %v392
        %vm417 = vcmp.eq.s32.totalorder %v304, %v393
        %vm418 = vcmp.eq.s32.totalorder %v305, %v386
        %vm419 = vcmp.eq.s32.totalorder %v305, %v387
        %vm420 = vcmp.eq.s32.totalorder %v305, %v388
        %vm421 = vcmp.eq.s32.totalorder %v305, %v389
        %vm422 = vcmp.eq.s32.totalorder %v305, %v390
        %vm423 = vcmp.eq.s32.totalorder %v305, %v391
        %vm424 = vcmp.eq.s32.totalorder %v305, %v392
        %vm425 = vcmp.eq.s32.totalorder %v305, %v393
        %vm426 = vcmp.eq.s32.totalorder %v306, %v386
        %vm427 = vcmp.eq.s32.totalorder %v306, %v387
        %vm428 = vcmp.eq.s32.totalorder %v306, %v388
        %vm429 = vcmp.eq.s32.totalorder %v306, %v389
        %vm430 = vcmp.eq.s32.totalorder %v306, %v390
        %vm431 = vcmp.eq.s32.totalorder %v306, %v391
        %vm432 = vcmp.eq.s32.totalorder %v306, %v392
        %vm433 = vcmp.eq.s32.totalorder %v306, %v393
        %vm434 = vcmp.eq.s32.totalorder %v307, %v386
        %vm435 = vcmp.eq.s32.totalorder %v307, %v387
        %vm436 = vcmp.eq.s32.totalorder %v307, %v388
        %vm437 = vcmp.eq.s32.totalorder %v307, %v389
        %vm438 = vcmp.eq.s32.totalorder %v307, %v390
        %vm439 = vcmp.eq.s32.totalorder %v307, %v391
        %vm440 = vcmp.eq.s32.totalorder %v307, %v392
        %vm441 = vcmp.eq.s32.totalorder %v307, %v393
        %vm442 = vcmp.eq.s32.totalorder %v308, %v386
        %vm443 = vcmp.eq.s32.totalorder %v308, %v387
        %vm444 = vcmp.eq.s32.totalorder %v308, %v388
        %vm445 = vcmp.eq.s32.totalorder %v308, %v389
        %vm446 = vcmp.eq.s32.totalorder %v308, %v390
        %vm447 = vcmp.eq.s32.totalorder %v308, %v391
        %vm448 = vcmp.eq.s32.totalorder %v308, %v392
        %vm449 = vcmp.eq.s32.totalorder %v308, %v393
        %vm450 = vcmp.eq.s32.totalorder %v309, %v386
        %vm451 = vcmp.eq.s32.totalorder %v309, %v387
        %vm452 = vcmp.eq.s32.totalorder %v309, %v388
        %vm453 = vcmp.eq.s32.totalorder %v309, %v389
        %vm454 = vcmp.eq.s32.totalorder %v309, %v390
        %vm455 = vcmp.eq.s32.totalorder %v309, %v391
        %vm456 = vcmp.eq.s32.totalorder %v309, %v392
        %vm457 = vcmp.eq.s32.totalorder %v309, %v393
        %vm458 = vmor %vm319, %vm394
        %vm459 = vmor %vm320, %vm395
        %vm460 = vmor %vm321, %vm396
        %vm461 = vmor %vm322, %vm397
        %vm462 = vmor %vm323, %vm398
        %vm463 = vmor %vm324, %vm399
        %vm464 = vmor %vm325, %vm400
        %vm465 = vmor %vm326, %vm401
        %vm466 = vmor %vm327, %vm402
        %vm467 = vmor %vm328, %vm403
        %vm468 = vmor %vm329, %vm404
        %vm469 = vmor %vm330, %vm405
        %vm470 = vmor %vm331, %vm406
        %vm471 = vmor %vm332, %vm407
        %vm472 = vmor %vm333, %vm408
        %vm473 = vmor %vm334, %vm409
        %vm474 = vmor %vm335, %vm410
        %vm475 = vmor %vm336, %vm411
        %vm476 = vmor %vm337, %vm412
        %vm477 = vmor %vm338, %vm413
        %vm478 = vmor %vm339, %vm414
        %vm479 = vmor %vm340, %vm415
        %vm480 = vmor %vm341, %vm416
        %vm481 = vmor %vm342, %vm417
        %vm482 = vmor %vm343, %vm418
        %vm483 = vmor %vm344, %vm419
        %vm484 = vmor %vm345, %vm420
        %vm485 = vmor %vm346, %vm421
        %vm486 = vmor %vm347, %vm422
        %vm487 = vmor %vm348, %vm423
        %vm488 = vmor %vm349, %vm424
        %vm489 = vmor %vm350, %vm425
        %vm490 = vmor %vm351, %vm426
        %vm491 = vmor %vm352, %vm427
        %vm492 = vmor %vm353, %vm428
        %vm493 = vmor %vm354, %vm429
        %vm494 = vmor %vm355, %vm430
        %vm495 = vmor %vm356, %vm431
        %vm496 = vmor %vm357, %vm432
        %vm497 = vmor %vm358, %vm433
        %vm498 = vmor %vm359, %vm434
        %vm499 = vmor %vm360, %vm435
        %vm500 = vmor %vm361, %vm436
        %vm501 = vmor %vm362, %vm437
        %vm502 = vmor %vm363, %vm438
        %vm503 = vmor %vm364, %vm439
        %vm504 = vmor %vm365, %vm440
        %vm505 = vmor %vm366, %vm441
        %vm506 = vmor %vm367, %vm442
        %vm507 = vmor %vm368, %vm443
        %vm508 = vmor %vm369, %vm444
        %vm509 = vmor %vm370, %vm445
        %vm510 = vmor %vm371, %vm446
        %vm511 = vmor %vm372, %vm447
        %vm512 = vmor %vm373, %vm448
        %vm513 = vmor %vm374, %vm449
        %vm514 = vmor %vm375, %vm450
        %vm515 = vmor %vm376, %vm451
        %vm516 = vmor %vm377, %vm452
        %vm517 = vmor %vm378, %vm453
        %vm518 = vmor %vm379, %vm454
        %vm519 = vmor %vm380, %vm455
        %vm520 = vmor %vm381, %vm456
        %vm521 = vmor %vm382, %vm457
        %s522 = scalar_lea.vmem %s267, 2 [#allocation3]
        %v523 = vld [vmem:[%s522] ss:$4 sm:$0xff]
        %v524 = vadd.s32 %v523, 48
        %v525 = vperm.slane %v524, 0
        %v526 = vperm.slane %v524, 1
        %v527 = vperm.slane %v524, 2
        %v528 = vperm.slane %v524, 3
        %v529 = vperm.slane %v524, 4
        %v530 = vperm.slane %v524, 5
        %v531 = vperm.slane %v524, 6
        %v532 = vperm.slane %v524, 7
        %vm533 = vcmp.eq.s32.totalorder %v302, %v525
        %vm534 = vcmp.eq.s32.totalorder %v302, %v526
        %vm535 = vcmp.eq.s32.totalorder %v302, %v527
        %vm536 = vcmp.eq.s32.totalorder %v302, %v528
        %vm537 = vcmp.eq.s32.totalorder %v302, %v529
        %vm538 = vcmp.eq.s32.totalorder %v302, %v530
        %vm539 = vcmp.eq.s32.totalorder %v302, %v531
        %vm540 = vcmp.eq.s32.totalorder %v302, %v532
        %vm541 = vcmp.eq.s32.totalorder %v303, %v525
        %vm542 = vcmp.eq.s32.totalorder %v303, %v526
        %vm543 = vcmp.eq.s32.totalorder %v303, %v527
        %vm544 = vcmp.eq.s32.totalorder %v303, %v528
        %vm545 = vcmp.eq.s32.totalorder %v303, %v529
        %vm546 = vcmp.eq.s32.totalorder %v303, %v530
        %vm547 = vcmp.eq.s32.totalorder %v303, %v531
        %vm548 = vcmp.eq.s32.totalorder %v303, %v532
        %vm549 = vcmp.eq.s32.totalorder %v304, %v525
        %vm550 = vcmp.eq.s32.totalorder %v304, %v526
        %vm551 = vcmp.eq.s32.totalorder %v304, %v527
        %vm552 = vcmp.eq.s32.totalorder %v304, %v528
        %vm553 = vcmp.eq.s32.totalorder %v304, %v529
        %vm554 = vcmp.eq.s32.totalorder %v304, %v530
        %vm555 = vcmp.eq.s32.totalorder %v304, %v531
        %vm556 = vcmp.eq.s32.totalorder %v304, %v532
        %vm557 = vcmp.eq.s32.totalorder %v305, %v525
        %vm558 = vcmp.eq.s32.totalorder %v305, %v526
        %vm559 = vcmp.eq.s32.totalorder %v305, %v527
        %vm560 = vcmp.eq.s32.totalorder %v305, %v528
        %vm561 = vcmp.eq.s32.totalorder %v305, %v529
        %vm562 = vcmp.eq.s32.totalorder %v305, %v530
        %vm563 = vcmp.eq.s32.totalorder %v305, %v531
        %vm564 = vcmp.eq.s32.totalorder %v305, %v532
        %vm565 = vcmp.eq.s32.totalorder %v306, %v525
        %vm566 = vcmp.eq.s32.totalorder %v306, %v526
        %vm567 = vcmp.eq.s32.totalorder %v306, %v527
        %vm568 = vcmp.eq.s32.totalorder %v306, %v528
        %vm569 = vcmp.eq.s32.totalorder %v306, %v529
        %vm570 = vcmp.eq.s32.totalorder %v306, %v530
        %vm571 = vcmp.eq.s32.totalorder %v306, %v531
        %vm572 = vcmp.eq.s32.totalorder %v306, %v532
        %vm573 = vcmp.eq.s32.totalorder %v307, %v525
        %vm574 = vcmp.eq.s32.totalorder %v307, %v526
        %vm575 = vcmp.eq.s32.totalorder %v307, %v527
        %vm576 = vcmp.eq.s32.totalorder %v307, %v528
        %vm577 = vcmp.eq.s32.totalorder %v307, %v529
        %vm578 = vcmp.eq.s32.totalorder %v307, %v530
        %vm579 = vcmp.eq.s32.totalorder %v307, %v531
        %vm580 = vcmp.eq.s32.totalorder %v307, %v532
        %vm581 = vcmp.eq.s32.totalorder %v308, %v525
        %vm582 = vcmp.eq.s32.totalorder %v308, %v526
        %vm583 = vcmp.eq.s32.totalorder %v308, %v527
        %vm584 = vcmp.eq.s32.totalorder %v308, %v528
        %vm585 = vcmp.eq.s32.totalorder %v308, %v529
        %vm586 = vcmp.eq.s32.totalorder %v308, %v530
        %vm587 = vcmp.eq.s32.totalorder %v308, %v531
        %vm588 = vcmp.eq.s32.totalorder %v308, %v532
        %vm589 = vcmp.eq.s32.totalorder %v309, %v525
        %vm590 = vcmp.eq.s32.totalorder %v309, %v526
        %vm591 = vcmp.eq.s32.totalorder %v309, %v527
        %vm592 = vcmp.eq.s32.totalorder %v309, %v528
        %vm593 = vcmp.eq.s32.totalorder %v309, %v529
        %vm594 = vcmp.eq.s32.totalorder %v309, %v530
        %vm595 = vcmp.eq.s32.totalorder %v309, %v531
        %vm596 = vcmp.eq.s32.totalorder %v309, %v532
        %vm597 = vmor %vm458, %vm533
        %vm598 = vmor %vm459, %vm534
        %vm599 = vmor %vm460, %vm535
        %vm600 = vmor %vm461, %vm536
        %vm601 = vmor %vm462, %vm537
        %vm602 = vmor %vm463, %vm538
        %vm603 = vmor %vm464, %vm539
        %vm604 = vmor %vm465, %vm540
        %vm605 = vmor %vm466, %vm541
        %vm606 = vmor %vm467, %vm542
        %vm607 = vmor %vm468, %vm543
        %vm608 = vmor %vm469, %vm544
        %vm609 = vmor %vm470, %vm545
        %vm610 = vmor %vm471, %vm546
        %vm611 = vmor %vm472, %vm547
        %vm612 = vmor %vm473, %vm548
        %vm613 = vmor %vm474, %vm549
        %vm614 = vmor %vm475, %vm550
        %vm615 = vmor %vm476, %vm551
        %vm616 = vmor %vm477, %vm552
        %vm617 = vmor %vm478, %vm553
        %vm618 = vmor %vm479, %vm554
        %vm619 = vmor %vm480, %vm555
        %vm620 = vmor %vm481, %vm556
        %vm621 = vmor %vm482, %vm557
        %vm622 = vmor %vm483, %vm558
        %vm623 = vmor %vm484, %vm559
        %vm624 = vmor %vm485, %vm560
        %vm625 = vmor %vm486, %vm561
        %vm626 = vmor %vm487, %vm562
        %vm627 = vmor %vm488, %vm563
        %vm628 = vmor %vm489, %vm564
        %vm629 = vmor %vm490, %vm565
        %vm630 = vmor %vm491, %vm566
        %vm631 = vmor %vm492, %vm567
        %vm632 = vmor %vm493, %vm568
        %vm633 = vmor %vm494, %vm569
        %vm634 = vmor %vm495, %vm570
        %vm635 = vmor %vm496, %vm571
        %vm636 = vmor %vm497, %vm572
        %vm637 = vmor %vm498, %vm573
        %vm638 = vmor %vm499, %vm574
        %vm639 = vmor %vm500, %vm575
        %vm640 = vmor %vm501, %vm576
        %vm641 = vmor %vm502, %vm577
        %vm642 = vmor %vm503, %vm578
        %vm643 = vmor %vm504, %vm579
        %vm644 = vmor %vm505, %vm580
        %vm645 = vmor %vm506, %vm581
        %vm646 = vmor %vm507, %vm582
        %vm647 = vmor %vm508, %vm583
        %vm648 = vmor %vm509, %vm584
        %vm649 = vmor %vm510, %vm585
        %vm650 = vmor %vm511, %vm586
        %vm651 = vmor %vm512, %vm587
        %vm652 = vmor %vm513, %vm588
        %vm653 = vmor %vm514, %vm589
        %vm654 = vmor %vm515, %vm590
        %vm655 = vmor %vm516, %vm591
        %vm656 = vmor %vm517, %vm592
        %vm657 = vmor %vm518, %vm593
        %vm658 = vmor %vm519, %vm594
        %vm659 = vmor %vm520, %vm595
        %vm660 = vmor %vm521, %vm596
        %v661 = vsel %vm597, 1, 0
        %v662 = vsel %vm598, 1, 0
        %v663 = vsel %vm599, 1, 0
        %v664 = vsel %vm600, 1, 0
        %v665 = vsel %vm601, 1, 0
        %v666 = vsel %vm602, 1, 0
        %v667 = vsel %vm603, 1, 0
        %v668 = vsel %vm604, 1, 0
        %v669 = vsel %vm605, 1, 0
        %v670 = vsel %vm606, 1, 0
        %v671 = vsel %vm607, 1, 0
        %v672 = vsel %vm608, 1, 0
        %v673 = vsel %vm609, 1, 0
        %v674 = vsel %vm610, 1, 0
        %v675 = vsel %vm611, 1, 0
        %v676 = vsel %vm612, 1, 0
        %v677 = vsel %vm613, 1, 0
        %v678 = vsel %vm614, 1, 0
        %v679 = vsel %vm615, 1, 0
        %v680 = vsel %vm616, 1, 0
        %v681 = vsel %vm617, 1, 0
        %v682 = vsel %vm618, 1, 0
        %v683 = vsel %vm619, 1, 0
        %v684 = vsel %vm620, 1, 0
        %v685 = vsel %vm621, 1, 0
        %v686 = vsel %vm622, 1, 0
        %v687 = vsel %vm623, 1, 0
        %v688 = vsel %vm624, 1, 0
        %v689 = vsel %vm625, 1, 0
        %v690 = vsel %vm626, 1, 0
        %v691 = vsel %vm627, 1, 0
        %v692 = vsel %vm628, 1, 0
        %v693 = vsel %vm629, 1, 0
        %v694 = vsel %vm630, 1, 0
        %v695 = vsel %vm631, 1, 0
        %v696 = vsel %vm632, 1, 0
        %v697 = vsel %vm633, 1, 0
        %v698 = vsel %vm634, 1, 0
        %v699 = vsel %vm635, 1, 0
        %v700 = vsel %vm636, 1, 0
        %v701 = vsel %vm637, 1, 0
        %v702 = vsel %vm638, 1, 0
        %v703 = vsel %vm639, 1, 0
        %v704 = vsel %vm640, 1, 0
        %v705 = vsel %vm641, 1, 0
        %v706 = vsel %vm642, 1, 0
        %v707 = vsel %vm643, 1, 0
        %v708 = vsel %vm644, 1, 0
        %v709 = vsel %vm645, 1, 0
        %v710 = vsel %vm646, 1, 0
        %v711 = vsel %vm647, 1, 0
        %v712 = vsel %vm648, 1, 0
        %v713 = vsel %vm649, 1, 0
        %v714 = vsel %vm650, 1, 0
        %v715 = vsel %vm651, 1, 0
        %v716 = vsel %vm652, 1, 0
        %v717 = vsel %vm653, 1, 0
        %v718 = vsel %vm654, 1, 0
        %v719 = vsel %vm655, 1, 0
        %v720 = vsel %vm656, 1, 0
        %v721 = vsel %vm657, 1, 0
        %v722 = vsel %vm658, 1, 0
        %v723 = vsel %vm659, 1, 0
        %v724 = vsel %vm660, 1, 0
        %v725 = vcvt.s32.f32 %v661
        %v726 = vcvt.s32.f32 %v662
        %v727 = vcvt.s32.f32 %v663
        %v728 = vcvt.s32.f32 %v664
        %v729 = vcvt.s32.f32 %v665
        %v730 = vcvt.s32.f32 %v666
        %v731 = vcvt.s32.f32 %v667
        %v732 = vcvt.s32.f32 %v668
        %v733 = vcvt.s32.f32 %v669
        %v734 = vcvt.s32.f32 %v670
        %v735 = vcvt.s32.f32 %v671
        %v736 = vcvt.s32.f32 %v672
        %v737 = vcvt.s32.f32 %v673
        %v738 = vcvt.s32.f32 %v674
        %v739 = vcvt.s32.f32 %v675
        %v740 = vcvt.s32.f32 %v676
        %v741 = vcvt.s32.f32 %v677
        %v742 = vcvt.s32.f32 %v678
        %v743 = vcvt.s32.f32 %v679
        %v744 = vcvt.s32.f32 %v680
        %v745 = vcvt.s32.f32 %v681
        %v746 = vcvt.s32.f32 %v682
        %v747 = vcvt.s32.f32 %v683
        %v748 = vcvt.s32.f32 %v684
        %v749 = vcvt.s32.f32 %v685
        %v750 = vcvt.s32.f32 %v686
        %v751 = vcvt.s32.f32 %v687
        %v752 = vcvt.s32.f32 %v688
        %v753 = vcvt.s32.f32 %v689
        %v754 = vcvt.s32.f32 %v690
        %v755 = vcvt.s32.f32 %v691
        %v756 = vcvt.s32.f32 %v692
        %v757 = vcvt.s32.f32 %v693
        %v758 = vcvt.s32.f32 %v694
        %v759 = vcvt.s32.f32 %v695
        %v760 = vcvt.s32.f32 %v696
        %v761 = vcvt.s32.f32 %v697
        %v762 = vcvt.s32.f32 %v698
        %v763 = vcvt.s32.f32 %v699
        %v764 = vcvt.s32.f32 %v700
        %v765 = vcvt.s32.f32 %v701
        %v766 = vcvt.s32.f32 %v702
        %v767 = vcvt.s32.f32 %v703
        %v768 = vcvt.s32.f32 %v704
        %v769 = vcvt.s32.f32 %v705
        %v770 = vcvt.s32.f32 %v706
        %v771 = vcvt.s32.f32 %v707
        %v772 = vcvt.s32.f32 %v708
        %v773 = vcvt.s32.f32 %v709
        %v774 = vcvt.s32.f32 %v710
        %v775 = vcvt.s32.f32 %v711
        %v776 = vcvt.s32.f32 %v712
        %v777 = vcvt.s32.f32 %v713
        %v778 = vcvt.s32.f32 %v714
        %v779 = vcvt.s32.f32 %v715
        %v780 = vcvt.s32.f32 %v716
        %v781 = vcvt.s32.f32 %v717
        %v782 = vcvt.s32.f32 %v718
        %v783 = vcvt.s32.f32 %v719
        %v784 = vcvt.s32.f32 %v720
        %v785 = vcvt.s32.f32 %v721
        %v786 = vcvt.s32.f32 %v722
        %v787 = vcvt.s32.f32 %v723
        %v788 = vcvt.s32.f32 %v724
        %v789 = vld [vmem:[%s1] sm:$0xff]
        %v790 = vld [vmem:[%s1 + $0x8] sm:$0xff]
        %v791 = vld [vmem:[%s1 + $0x10] sm:$0xf]
        %v792 = vld [vmem:[%s2] sm:$0xff]
        %v793 = vld [vmem:[%s2 + $0x8] sm:$0xff]
        %v794 = vld [vmem:[%s2 + $0x10] sm:$0xf]
        %796 = vset.pattern.permute.xlu0 0
        %797 = vperm.xlu0 %796, %v792
        %v798 = vpop.permute.xlu0 %797
        %801 = vset.pattern.permute.xlu0 0
        %802 = vperm.xlu0 %801, %v793
        %v803 = vpop.permute.xlu0 %802
        %806 = vset.pattern.permute.xlu0 0
        %807 = vperm.xlu0 %806, %v794
        %v808 = vpop.permute.xlu0 %807
        %vm810 = vcmask 490496
        %v812 = vsel %vm810, %v789, 0
        %v815 = vsel %vm810, %v790, 0
        %v818 = vsel %vm810, %v791, 0
        %vm820 = vcmask 1043456
        %v822 = vsel %vm820, %v781, 0
        %v825 = vsel %vm820, %v782, 0
        %v828 = vsel %vm820, %v783, 0
        %v831 = vsel %vm820, %v784, 0
        %v834 = vsel %vm820, %v785, 0
        %v837 = vsel %vm820, %v786, 0
        %v840 = vsel %vm820, %v787, 0
        %v843 = vsel %vm820, %v788, 0
        %845 = vmatpush.msra.mxu0 0.0
        %846 = vmatpush.msra.mxu0 0.0
        %847 = vmatpush.msra.mxu0 0.0
        %848 = vmatpush.msra.mxu0 0.0
        %849 = vmatpush.msra.mxu0 0.0
        %850 = vmatpush.msra.mxu0 0.0
        %851 = vmatpush.msra.mxu0 0.0
        %852 = vmatpush.msra.mxu0 0.0
        %853 = vmatpush.msra.mxu0 %v822
        %854 = vmatpush.msra.mxu0 %v773
        %855 = vmatpush.msra.mxu0 %v765
        %856 = vmatpush.msra.mxu0 %v757
        %857 = vmatpush.msra.mxu0 %v749
        %858 = vmatpush.msra.mxu0 %v741
        %859 = vmatpush.msra.mxu0 %v733
        %860 = vmatpush.msra.mxu0 %v725
        %861 = vmatmul.f32.gmra.mxu0 %v812
        %v862 = vpop.f32.mrf.mxu0
        %v863 = vadd.f32 %v798, %v862
        %864 = vmatmul.f32.gmra.mxu0 %v815
        %v865 = vpop.f32.mrf.mxu0
        %v866 = vadd.f32 %v803, %v865
        %867 = vmatmul.f32.gmra.mxu0 %v818
        %v868 = vpop.f32.mrf.mxu0
        %v869 = vadd.f32 %v808, %v868
        %870 = vdwg.mxu0
        %871 = vmatpush.msra.mxu0 0.0
        %872 = vmatpush.msra.mxu0 0.0
        %873 = vmatpush.msra.mxu0 0.0
        %874 = vmatpush.msra.mxu0 0.0
        %875 = vmatpush.msra.mxu0 0.0
        %876 = vmatpush.msra.mxu0 0.0
        %877 = vmatpush.msra.mxu0 0.0
        %878 = vmatpush.msra.mxu0 0.0
        %879 = vmatpush.msra.mxu0 %v825
        %880 = vmatpush.msra.mxu0 %v774
        %881 = vmatpush.msra.mxu0 %v766
        %882 = vmatpush.msra.mxu0 %v758
        %883 = vmatpush.msra.mxu0 %v750
        %884 = vmatpush.msra.mxu0 %v742
        %885 = vmatpush.msra.mxu0 %v734
        %886 = vmatpush.msra.mxu0 %v726
        %887 = vmatmul.f32.gmra.mxu0 %v812
        %v888 = vpop.f32.mrf.mxu0
        %v889 = vadd.f32 %v798, %v888
        %890 = vmatmul.f32.gmra.mxu0 %v815
        %v891 = vpop.f32.mrf.mxu0
        %v892 = vadd.f32 %v803, %v891
        %893 = vmatmul.f32.gmra.mxu0 %v818
        %v894 = vpop.f32.mrf.mxu0
        %v895 = vadd.f32 %v808, %v894
        %896 = vdwg.mxu0
        %897 = vmatpush.msra.mxu0 0.0
        %898 = vmatpush.msra.mxu0 0.0
        %899 = vmatpush.msra.mxu0 0.0
        %900 = vmatpush.msra.mxu0 0.0
        %901 = vmatpush.msra.mxu0 0.0
        %902 = vmatpush.msra.mxu0 0.0
        %903 = vmatpush.msra.mxu0 0.0
        %904 = vmatpush.msra.mxu0 0.0
        %905 = vmatpush.msra.mxu0 %v828
        %906 = vmatpush.msra.mxu0 %v775
        %907 = vmatpush.msra.mxu0 %v767
        %908 = vmatpush.msra.mxu0 %v759
        %909 = vmatpush.msra.mxu0 %v751
        %910 = vmatpush.msra.mxu0 %v743
        %911 = vmatpush.msra.mxu0 %v735
        %912 = vmatpush.msra.mxu0 %v727
        %913 = vmatmul.f32.gmra.mxu0 %v812
        %v914 = vpop.f32.mrf.mxu0
        %v915 = vadd.f32 %v798, %v914
        %916 = vmatmul.f32.gmra.mxu0 %v815
        %v917 = vpop.f32.mrf.mxu0
        %v918 = vadd.f32 %v803, %v917
        %919 = vmatmul.f32.gmra.mxu0 %v818
        %v920 = vpop.f32.mrf.mxu0
        %v921 = vadd.f32 %v808, %v920
        %922 = vdwg.mxu0
        %923 = vmatpush.msra.mxu0 0.0
        %924 = vmatpush.msra.mxu0 0.0
        %925 = vmatpush.msra.mxu0 0.0
        %926 = vmatpush.msra.mxu0 0.0
        %927 = vmatpush.msra.mxu0 0.0
        %928 = vmatpush.msra.mxu0 0.0
        %929 = vmatpush.msra.mxu0 0.0
        %930 = vmatpush.msra.mxu0 0.0
        %931 = vmatpush.msra.mxu0 %v831
        %932 = vmatpush.msra.mxu0 %v776
        %933 = vmatpush.msra.mxu0 %v768
        %934 = vmatpush.msra.mxu0 %v760
        %935 = vmatpush.msra.mxu0 %v752
        %936 = vmatpush.msra.mxu0 %v744
        %937 = vmatpush.msra.mxu0 %v736
        %938 = vmatpush.msra.mxu0 %v728
        %939 = vmatmul.f32.gmra.mxu0 %v812
        %v940 = vpop.f32.mrf.mxu0
        %v941 = vadd.f32 %v798, %v940
        %942 = vmatmul.f32.gmra.mxu0 %v815
        %v943 = vpop.f32.mrf.mxu0
        %v944 = vadd.f32 %v803, %v943
        %945 = vmatmul.f32.gmra.mxu0 %v818
        %v946 = vpop.f32.mrf.mxu0
        %v947 = vadd.f32 %v808, %v946
        %948 = vdwg.mxu0
        %949 = vmatpush.msra.mxu0 0.0
        %950 = vmatpush.msra.mxu0 0.0
        %951 = vmatpush.msra.mxu0 0.0
        %952 = vmatpush.msra.mxu0 0.0
        %953 = vmatpush.msra.mxu0 0.0
        %954 = vmatpush.msra.mxu0 0.0
        %955 = vmatpush.msra.mxu0 0.0
        %956 = vmatpush.msra.mxu0 0.0
        %957 = vmatpush.msra.mxu0 %v834
        %958 = vmatpush.msra.mxu0 %v777
        %959 = vmatpush.msra.mxu0 %v769
        %960 = vmatpush.msra.mxu0 %v761
        %961 = vmatpush.msra.mxu0 %v753
        %962 = vmatpush.msra.mxu0 %v745
        %963 = vmatpush.msra.mxu0 %v737
        %964 = vmatpush.msra.mxu0 %v729
        %965 = vmatmul.f32.gmra.mxu0 %v812
        %v966 = vpop.f32.mrf.mxu0
        %v967 = vadd.f32 %v798, %v966
        %968 = vmatmul.f32.gmra.mxu0 %v815
        %v969 = vpop.f32.mrf.mxu0
        %v970 = vadd.f32 %v803, %v969
        %971 = vmatmul.f32.gmra.mxu0 %v818
        %v972 = vpop.f32.mrf.mxu0
        %v973 = vadd.f32 %v808, %v972
        %974 = vdwg.mxu0
        %975 = vmatpush.msra.mxu0 0.0
        %976 = vmatpush.msra.mxu0 0.0
        %977 = vmatpush.msra.mxu0 0.0
        %978 = vmatpush.msra.mxu0 0.0
        %979 = vmatpush.msra.mxu0 0.0
        %980 = vmatpush.msra.mxu0 0.0
        %981 = vmatpush.msra.mxu0 0.0
        %982 = vmatpush.msra.mxu0 0.0
        %983 = vmatpush.msra.mxu0 %v837
        %984 = vmatpush.msra.mxu0 %v778
        %985 = vmatpush.msra.mxu0 %v770
        %986 = vmatpush.msra.mxu0 %v762
        %987 = vmatpush.msra.mxu0 %v754
        %988 = vmatpush.msra.mxu0 %v746
        %989 = vmatpush.msra.mxu0 %v738
        %990 = vmatpush.msra.mxu0 %v730
        %991 = vmatmul.f32.gmra.mxu0 %v812
        %v992 = vpop.f32.mrf.mxu0
        %v993 = vadd.f32 %v798, %v992
        %994 = vmatmul.f32.gmra.mxu0 %v815
        %v995 = vpop.f32.mrf.mxu0
        %v996 = vadd.f32 %v803, %v995
        %997 = vmatmul.f32.gmra.mxu0 %v818
        %v998 = vpop.f32.mrf.mxu0
        %v999 = vadd.f32 %v808, %v998
        %1000 = vdwg.mxu0
        %1001 = vmatpush.msra.mxu0 0.0
        %1002 = vmatpush.msra.mxu0 0.0
        %1003 = vmatpush.msra.mxu0 0.0
        %1004 = vmatpush.msra.mxu0 0.0
        %1005 = vmatpush.msra.mxu0 0.0
        %1006 = vmatpush.msra.mxu0 0.0
        %1007 = vmatpush.msra.mxu0 0.0
        %1008 = vmatpush.msra.mxu0 0.0
        %1009 = vmatpush.msra.mxu0 %v840
        %1010 = vmatpush.msra.mxu0 %v779
        %1011 = vmatpush.msra.mxu0 %v771
        %1012 = vmatpush.msra.mxu0 %v763
        %1013 = vmatpush.msra.mxu0 %v755
        %1014 = vmatpush.msra.mxu0 %v747
        %1015 = vmatpush.msra.mxu0 %v739
        %1016 = vmatpush.msra.mxu0 %v731
        %1017 = vmatmul.f32.gmra.mxu0 %v812
        %v1018 = vpop.f32.mrf.mxu0
        %v1019 = vadd.f32 %v798, %v1018
        %1020 = vmatmul.f32.gmra.mxu0 %v815
        %v1021 = vpop.f32.mrf.mxu0
        %v1022 = vadd.f32 %v803, %v1021
        %1023 = vmatmul.f32.gmra.mxu0 %v818
        %v1024 = vpop.f32.mrf.mxu0
        %v1025 = vadd.f32 %v808, %v1024
        %1026 = vdwg.mxu0
        %1027 = vmatpush.msra.mxu0 0.0
        %1028 = vmatpush.msra.mxu0 0.0
        %1029 = vmatpush.msra.mxu0 0.0
        %1030 = vmatpush.msra.mxu0 0.0
        %1031 = vmatpush.msra.mxu0 0.0
        %1032 = vmatpush.msra.mxu0 0.0
        %1033 = vmatpush.msra.mxu0 0.0
        %1034 = vmatpush.msra.mxu0 0.0
        %1035 = vmatpush.msra.mxu0 %v843
        %1036 = vmatpush.msra.mxu0 %v780
        %1037 = vmatpush.msra.mxu0 %v772
        %1038 = vmatpush.msra.mxu0 %v764
        %1039 = vmatpush.msra.mxu0 %v756
        %1040 = vmatpush.msra.mxu0 %v748
        %1041 = vmatpush.msra.mxu0 %v740
        %1042 = vmatpush.msra.mxu0 %v732
        %1043 = vmatmul.f32.gmra.mxu0 %v812
        %v1044 = vpop.f32.mrf.mxu0
        %v1045 = vadd.f32 %v798, %v1044
        %1046 = vmatmul.f32.gmra.mxu0 %v815
        %v1047 = vpop.f32.mrf.mxu0
        %v1048 = vadd.f32 %v803, %v1047
        %1049 = vmatmul.f32.gmra.mxu0 %v818
        %v1050 = vpop.f32.mrf.mxu0
        %v1051 = vadd.f32 %v808, %v1050
        %1052 = vdwg.mxu0
        %v1053 = vmax.f32 %v863, 0.0
        %v1054 = vmax.f32 %v889, 0.0
        %v1055 = vmax.f32 %v915, 0.0
        %v1056 = vmax.f32 %v941, 0.0
        %v1057 = vmax.f32 %v967, 0.0
        %v1058 = vmax.f32 %v993, 0.0
        %v1059 = vmax.f32 %v1019, 0.0
        %v1060 = vmax.f32 %v1045, 0.0
        %v1061 = vmax.f32 %v866, 0.0
        %v1062 = vmax.f32 %v892, 0.0
        %v1063 = vmax.f32 %v918, 0.0
        %v1064 = vmax.f32 %v944, 0.0
        %v1065 = vmax.f32 %v970, 0.0
        %v1066 = vmax.f32 %v996, 0.0
        %v1067 = vmax.f32 %v1022, 0.0
        %v1068 = vmax.f32 %v1048, 0.0
        %v1069 = vmax.f32 %v869, 0.0
        %v1070 = vmax.f32 %v895, 0.0
        %v1071 = vmax.f32 %v921, 0.0
        %v1072 = vmax.f32 %v947, 0.0
        %v1073 = vmax.f32 %v973, 0.0
        %v1074 = vmax.f32 %v999, 0.0
        %v1075 = vmax.f32 %v1025, 0.0
        %v1076 = vmax.f32 %v1051, 0.0
        %v1077 = vld [vmem:[%s3] sm:$0xff]
        %v1078 = vld [vmem:[%s3 + $0x8] sm:$0x3]
        %v1079 = vld [vmem:[%s4] sm:$0xff]
        %v1080 = vld [vmem:[%s4 + $0x8] sm:$0x3]
        %1082 = vset.pattern.permute.xlu0 0
        %1083 = vperm.xlu0 %1082, %v1079
        %v1084 = vpop.permute.xlu0 %1083
        %1087 = vset.pattern.permute.xlu0 0
        %1088 = vperm.xlu0 %1087, %v1080
        %v1089 = vpop.permute.xlu0 %1088
        %vm1091 = vcmask 162816
        %v1093 = vsel %vm1091, %v1077, 0
        %v1096 = vsel %vm1091, %v1078, 0
        %v1099 = vsel %vm820, %v1069, 0
        %v1102 = vsel %vm820, %v1070, 0
        %v1105 = vsel %vm820, %v1071, 0
        %v1108 = vsel %vm820, %v1072, 0
        %v1111 = vsel %vm820, %v1073, 0
        %v1114 = vsel %vm820, %v1074, 0
        %v1117 = vsel %vm820, %v1075, 0
        %v1120 = vsel %vm820, %v1076, 0
        %1122 = vmatpush.msra.mxu0 0.0
        %1123 = vmatpush.msra.mxu0 0.0
        %1124 = vmatpush.msra.mxu0 0.0
        %1125 = vmatpush.msra.mxu0 0.0
        %1126 = vmatpush.msra.mxu0 0.0
        %1127 = vmatpush.msra.mxu0 0.0
        %1128 = vmatpush.msra.mxu0 0.0
        %1129 = vmatpush.msra.mxu0 0.0
        %1130 = vmatpush.msra.mxu0 0.0
        %1131 = vmatpush.msra.mxu0 0.0
        %1132 = vmatpush.msra.mxu0 0.0
        %1133 = vmatpush.msra.mxu0 0.0
        %1134 = vmatpush.msra.mxu0 0.0
        %1135 = vmatpush.msra.mxu0 %v1099
        %1136 = vmatpush.msra.mxu0 %v1061
        %1137 = vmatpush.msra.mxu0 %v1053
        %1138 = vmatmul.f32.gmra.mxu0 %v1093
        %v1139 = vpop.f32.mrf.mxu0
        %v1140 = vadd.f32 %v1084, %v1139
        %1141 = vmatmul.f32.gmra.mxu0 %v1096
        %v1142 = vpop.f32.mrf.mxu0
        %v1143 = vadd.f32 %v1089, %v1142
        %1144 = vdwg.mxu0
        %1145 = vmatpush.msra.mxu0 0.0
        %1146 = vmatpush.msra.mxu0 0.0
        %1147 = vmatpush.msra.mxu0 0.0
        %1148 = vmatpush.msra.mxu0 0.0
        %1149 = vmatpush.msra.mxu0 0.0
        %1150 = vmatpush.msra.mxu0 0.0
        %1151 = vmatpush.msra.mxu0 0.0
        %1152 = vmatpush.msra.mxu0 0.0
        %1153 = vmatpush.msra.mxu0 0.0
        %1154 = vmatpush.msra.mxu0 0.0
        %1155 = vmatpush.msra.mxu0 0.0
        %1156 = vmatpush.msra.mxu0 0.0
        %1157 = vmatpush.msra.mxu0 0.0
        %1158 = vmatpush.msra.mxu0 %v1102
        %1159 = vmatpush.msra.mxu0 %v1062
        %1160 = vmatpush.msra.mxu0 %v1054
        %1161 = vmatmul.f32.gmra.mxu0 %v1093
        %v1162 = vpop.f32.mrf.mxu0
        %v1163 = vadd.f32 %v1084, %v1162
        %1164 = vmatmul.f32.gmra.mxu0 %v1096
        %v1165 = vpop.f32.mrf.mxu0
        %v1166 = vadd.f32 %v1089, %v1165
        %1167 = vdwg.mxu0
        %1168 = vmatpush.msra.mxu0 0.0
        %1169 = vmatpush.msra.mxu0 0.0
        %1170 = vmatpush.msra.mxu0 0.0
        %1171 = vmatpush.msra.mxu0 0.0
        %1172 = vmatpush.msra.mxu0 0.0
        %1173 = vmatpush.msra.mxu0 0.0
        %1174 = vmatpush.msra.mxu0 0.0
        %1175 = vmatpush.msra.mxu0 0.0
        %1176 = vmatpush.msra.mxu0 0.0
        %1177 = vmatpush.msra.mxu0 0.0
        %1178 = vmatpush.msra.mxu0 0.0
        %1179 = vmatpush.msra.mxu0 0.0
        %1180 = vmatpush.msra.mxu0 0.0
        %1181 = vmatpush.msra.mxu0 %v1105
        %1182 = vmatpush.msra.mxu0 %v1063
        %1183 = vmatpush.msra.mxu0 %v1055
        %1184 = vmatmul.f32.gmra.mxu0 %v1093
        %v1185 = vpop.f32.mrf.mxu0
        %v1186 = vadd.f32 %v1084, %v1185
        %1187 = vmatmul.f32.gmra.mxu0 %v1096
        %v1188 = vpop.f32.mrf.mxu0
        %v1189 = vadd.f32 %v1089, %v1188
        %1190 = vdwg.mxu0
        %1191 = vmatpush.msra.mxu0 0.0
        %1192 = vmatpush.msra.mxu0 0.0
        %1193 = vmatpush.msra.mxu0 0.0
        %1194 = vmatpush.msra.mxu0 0.0
        %1195 = vmatpush.msra.mxu0 0.0
        %1196 = vmatpush.msra.mxu0 0.0
        %1197 = vmatpush.msra.mxu0 0.0
        %1198 = vmatpush.msra.mxu0 0.0
        %1199 = vmatpush.msra.mxu0 0.0
        %1200 = vmatpush.msra.mxu0 0.0
        %1201 = vmatpush.msra.mxu0 0.0
        %1202 = vmatpush.msra.mxu0 0.0
        %1203 = vmatpush.msra.mxu0 0.0
        %1204 = vmatpush.msra.mxu0 %v1108
        %1205 = vmatpush.msra.mxu0 %v1064
        %1206 = vmatpush.msra.mxu0 %v1056
        %1207 = vmatmul.f32.gmra.mxu0 %v1093
        %v1208 = vpop.f32.mrf.mxu0
        %v1209 = vadd.f32 %v1084, %v1208
        %1210 = vmatmul.f32.gmra.mxu0 %v1096
        %v1211 = vpop.f32.mrf.mxu0
        %v1212 = vadd.f32 %v1089, %v1211
        %1213 = vdwg.mxu0
        %1214 = vmatpush.msra.mxu0 0.0
        %1215 = vmatpush.msra.mxu0 0.0
        %1216 = vmatpush.msra.mxu0 0.0
        %1217 = vmatpush.msra.mxu0 0.0
        %1218 = vmatpush.msra.mxu0 0.0
        %1219 = vmatpush.msra.mxu0 0.0
        %1220 = vmatpush.msra.mxu0 0.0
        %1221 = vmatpush.msra.mxu0 0.0
        %1222 = vmatpush.msra.mxu0 0.0
        %1223 = vmatpush.msra.mxu0 0.0
        %1224 = vmatpush.msra.mxu0 0.0
        %1225 = vmatpush.msra.mxu0 0.0
        %1226 = vmatpush.msra.mxu0 0.0
        %1227 = vmatpush.msra.mxu0 %v1111
        %1228 = vmatpush.msra.mxu0 %v1065
        %1229 = vmatpush.msra.mxu0 %v1057
        %1230 = vmatmul.f32.gmra.mxu0 %v1093
        %v1231 = vpop.f32.mrf.mxu0
        %v1232 = vadd.f32 %v1084, %v1231
        %1233 = vmatmul.f32.gmra.mxu0 %v1096
        %v1234 = vpop.f32.mrf.mxu0
        %v1235 = vadd.f32 %v1089, %v1234
        %1236 = vdwg.mxu0
        %1237 = vmatpush.msra.mxu0 0.0
        %1238 = vmatpush.msra.mxu0 0.0
        %1239 = vmatpush.msra.mxu0 0.0
        %1240 = vmatpush.msra.mxu0 0.0
        %1241 = vmatpush.msra.mxu0 0.0
        %1242 = vmatpush.msra.mxu0 0.0
        %1243 = vmatpush.msra.mxu0 0.0
        %1244 = vmatpush.msra.mxu0 0.0
        %1245 = vmatpush.msra.mxu0 0.0
        %1246 = vmatpush.msra.mxu0 0.0
        %1247 = vmatpush.msra.mxu0 0.0
        %1248 = vmatpush.msra.mxu0 0.0
        %1249 = vmatpush.msra.mxu0 0.0
        %1250 = vmatpush.msra.mxu0 %v1114
        %1251 = vmatpush.msra.mxu0 %v1066
        %1252 = vmatpush.msra.mxu0 %v1058
        %1253 = vmatmul.f32.gmra.mxu0 %v1093
        %v1254 = vpop.f32.mrf.mxu0
        %v1255 = vadd.f32 %v1084, %v1254
        %1256 = vmatmul.f32.gmra.mxu0 %v1096
        %v1257 = vpop.f32.mrf.mxu0
        %v1258 = vadd.f32 %v1089, %v1257
        %1259 = vdwg.mxu0
        %1260 = vmatpush.msra.mxu0 0.0
        %1261 = vmatpush.msra.mxu0 0.0
        %1262 = vmatpush.msra.mxu0 0.0
        %1263 = vmatpush.msra.mxu0 0.0
        %1264 = vmatpush.msra.mxu0 0.0
        %1265 = vmatpush.msra.mxu0 0.0
        %1266 = vmatpush.msra.mxu0 0.0
        %1267 = vmatpush.msra.mxu0 0.0
        %1268 = vmatpush.msra.mxu0 0.0
        %1269 = vmatpush.msra.mxu0 0.0
        %1270 = vmatpush.msra.mxu0 0.0
        %1271 = vmatpush.msra.mxu0 0.0
        %1272 = vmatpush.msra.mxu0 0.0
        %1273 = vmatpush.msra.mxu0 %v1117
        %1274 = vmatpush.msra.mxu0 %v1067
        %1275 = vmatpush.msra.mxu0 %v1059
        %1276 = vmatmul.f32.gmra.mxu0 %v1093
        %v1277 = vpop.f32.mrf.mxu0
        %v1278 = vadd.f32 %v1084, %v1277
        %1279 = vmatmul.f32.gmra.mxu0 %v1096
        %v1280 = vpop.f32.mrf.mxu0
        %v1281 = vadd.f32 %v1089, %v1280
        %1282 = vdwg.mxu0
        %1283 = vmatpush.msra.mxu0 0.0
        %1284 = vmatpush.msra.mxu0 0.0
        %1285 = vmatpush.msra.mxu0 0.0
        %1286 = vmatpush.msra.mxu0 0.0
        %1287 = vmatpush.msra.mxu0 0.0
        %1288 = vmatpush.msra.mxu0 0.0
        %1289 = vmatpush.msra.mxu0 0.0
        %1290 = vmatpush.msra.mxu0 0.0
        %1291 = vmatpush.msra.mxu0 0.0
        %1292 = vmatpush.msra.mxu0 0.0
        %1293 = vmatpush.msra.mxu0 0.0
        %1294 = vmatpush.msra.mxu0 0.0
        %1295 = vmatpush.msra.mxu0 0.0
        %1296 = vmatpush.msra.mxu0 %v1120
        %1297 = vmatpush.msra.mxu0 %v1068
        %1298 = vmatpush.msra.mxu0 %v1060
        %1299 = vmatmul.f32.gmra.mxu0 %v1093
        %v1300 = vpop.f32.mrf.mxu0
        %v1301 = vadd.f32 %v1084, %v1300
        %1302 = vmatmul.f32.gmra.mxu0 %v1096
        %v1303 = vpop.f32.mrf.mxu0
        %v1304 = vadd.f32 %v1089, %v1303
        %1305 = vdwg.mxu0
        %v1306 = vmax.f32 %v1140, 0.0
        %v1307 = vmax.f32 %v1163, 0.0
        %v1308 = vmax.f32 %v1186, 0.0
        %v1309 = vmax.f32 %v1209, 0.0
        %v1310 = vmax.f32 %v1232, 0.0
        %v1311 = vmax.f32 %v1255, 0.0
        %v1312 = vmax.f32 %v1278, 0.0
        %v1313 = vmax.f32 %v1301, 0.0
        %v1314 = vmax.f32 %v1143, 0.0
        %v1315 = vmax.f32 %v1166, 0.0
        %v1316 = vmax.f32 %v1189, 0.0
        %v1317 = vmax.f32 %v1212, 0.0
        %v1318 = vmax.f32 %v1235, 0.0
        %v1319 = vmax.f32 %v1258, 0.0
        %v1320 = vmax.f32 %v1281, 0.0
        %v1321 = vmax.f32 %v1304, 0.0
        %v1322 = vld [vmem:[%s5] sm:$0xff]
        %v1323 = vld [vmem:[%s5 + $0x8] sm:$0x3]
        %1325 = vset.pattern.permute.xlu0 0
        %1326 = vperm.xlu0 %1325, %v1322
        %v1327 = vpop.permute.xlu0 %1326
        %1330 = vset.pattern.permute.xlu0 0
        %1331 = vperm.xlu0 %1330, %v1323
        %v1332 = vpop.permute.xlu0 %1331
        %v1334 = vmul.f32 %v1327, %v1306
        %v1335 = vmul.f32 %v1327, %v1307
        %v1336 = vmul.f32 %v1327, %v1308
        %v1337 = vmul.f32 %v1327, %v1309
        %v1338 = vmul.f32 %v1327, %v1310
        %v1339 = vmul.f32 %v1327, %v1311
        %v1340 = vmul.f32 %v1327, %v1312
        %v1341 = vmul.f32 %v1327, %v1313
        %v1342 = vmul.f32 %v1332, %v1314
        %v1343 = vmul.f32 %v1332, %v1315
        %v1344 = vmul.f32 %v1332, %v1316
        %v1345 = vmul.f32 %v1332, %v1317
        %v1346 = vmul.f32 %v1332, %v1318
        %v1347 = vmul.f32 %v1332, %v1319
        %v1348 = vmul.f32 %v1332, %v1320
        %v1349 = vmul.f32 %v1332, %v1321
        %vm1350 = vcmask 1041408
        %v1351 = vsel %vm1350, %v1342, 0.0
        %v1352 = vadd.f32 %v1334, %v1351
        %v1353 = vrot.slane %v1352, 4
        %v1354 = vadd.f32 %v1352, %v1353
        %v1355 = vrot.slane %v1354, 2
        %v1356 = vadd.f32 %v1354, %v1355
        %v1357 = vrot.slane %v1356, 1
        %v1358 = vadd.f32 %v1356, %v1357
        %v1359 = vsel %vm1350, %v1343, 0.0
        %v1360 = vadd.f32 %v1335, %v1359
        %v1361 = vrot.slane %v1360, 4
        %v1362 = vadd.f32 %v1360, %v1361
        %v1363 = vrot.slane %v1362, 2
        %v1364 = vadd.f32 %v1362, %v1363
        %v1365 = vrot.slane %v1364, 1
        %v1366 = vadd.f32 %v1364, %v1365
        %v1367 = vsel %vm1350, %v1344, 0.0
        %v1368 = vadd.f32 %v1336, %v1367
        %v1369 = vrot.slane %v1368, 4
        %v1370 = vadd.f32 %v1368, %v1369
        %v1371 = vrot.slane %v1370, 2
        %v1372 = vadd.f32 %v1370, %v1371
        %v1373 = vrot.slane %v1372, 1
        %v1374 = vadd.f32 %v1372, %v1373
        %v1375 = vsel %vm1350, %v1345, 0.0
        %v1376 = vadd.f32 %v1337, %v1375
        %v1377 = vrot.slane %v1376, 4
        %v1378 = vadd.f32 %v1376, %v1377
        %v1379 = vrot.slane %v1378, 2
        %v1380 = vadd.f32 %v1378, %v1379
        %v1381 = vrot.slane %v1380, 1
        %v1382 = vadd.f32 %v1380, %v1381
        %v1383 = vsel %vm1350, %v1346, 0.0
        %v1384 = vadd.f32 %v1338, %v1383
        %v1385 = vrot.slane %v1384, 4
        %v1386 = vadd.f32 %v1384, %v1385
        %v1387 = vrot.slane %v1386, 2
        %v1388 = vadd.f32 %v1386, %v1387
        %v1389 = vrot.slane %v1388, 1
        %v1390 = vadd.f32 %v1388, %v1389
        %v1391 = vsel %vm1350, %v1347, 0.0
        %v1392 = vadd.f32 %v1339, %v1391
        %v1393 = vrot.slane %v1392, 4
        %v1394 = vadd.f32 %v1392, %v1393
        %v1395 = vrot.slane %v1394, 2
        %v1396 = vadd.f32 %v1394, %v1395
        %v1397 = vrot.slane %v1396, 1
        %v1398 = vadd.f32 %v1396, %v1397
        %v1399 = vsel %vm1350, %v1348, 0.0
        %v1400 = vadd.f32 %v1340, %v1399
        %v1401 = vrot.slane %v1400, 4
        %v1402 = vadd.f32 %v1400, %v1401
        %v1403 = vrot.slane %v1402, 2
        %v1404 = vadd.f32 %v1402, %v1403
        %v1405 = vrot.slane %v1404, 1
        %v1406 = vadd.f32 %v1404, %v1405
        %v1407 = vsel %vm1350, %v1349, 0.0
        %v1408 = vadd.f32 %v1341, %v1407
        %v1409 = vrot.slane %v1408, 4
        %v1410 = vadd.f32 %v1408, %v1409
        %v1411 = vrot.slane %v1410, 2
        %v1412 = vadd.f32 %v1410, %v1411
        %v1413 = vrot.slane %v1412, 1
        %v1414 = vadd.f32 %v1412, %v1413
        %v1415 = vld [vmem:[#allocation2] sm:$0x1]
        %1417 = vset.pattern.permute.xlu0 0
        %1418 = vperm.xlu0 %1417, %v1415
        %v1419 = vpop.permute.xlu0 %1418
        %v1421 = vperm.slane %v1419, 0
        %v1422 = vadd.f32 %v1358, %v1421
        %v1423 = vadd.f32 %v1366, %v1421
        %v1424 = vadd.f32 %v1374, %v1421
        %v1425 = vadd.f32 %v1382, %v1421
        %v1426 = vadd.f32 %v1390, %v1421
        %v1427 = vadd.f32 %v1398, %v1421
        %v1428 = vadd.f32 %v1406, %v1421
        %v1429 = vadd.f32 %v1414, %v1421
        %v1438 = vrot.slane %v1423, 7
        %v1439 = vrot.slane %v1424, 6
        %v1440 = vrot.slane %v1425, 5
        %v1441 = vrot.slane %v1426, 4
        %v1442 = vrot.slane %v1427, 3
        %v1443 = vrot.slane %v1428, 2
        %v1444 = vrot.slane %v1429, 1
        %vm1445 = vcmask 1040384
        %v1446 = vsel %vm1445, %v1422, %v1438
        %vm1447 = vcmask 1042434
        %v1448 = vsel %vm1447, %v1439, %v1440
        %v1449 = vsel %vm1350, %v1446, %v1448
        %vm1450 = vcmask 1044484
        %v1451 = vsel %vm1450, %v1441, %v1442
        %vm1452 = vcmask 1046534
        %v1453 = vsel %vm1452, %v1443, %v1444
        %vm1454 = vcmask 1045508
        %v1455 = vsel %vm1454, %v1451, %v1453
        %v1456 = vsel %vm820, %v1449, %v1455
        %1458 = vst [vmem:[%s298] sm:$0xff] %v1456
        %s1459 = sand.u32 %s186, 1
        %s1460 = scalar_lea.sflag [#allocation5], %s1459
        %s1461 = sand.u32 %s186, 1
        %s1462 = smul.addr %s1461, 8
        %s1463 = scalar_lea.vmem [#allocation6], %s1462
        // Predicated region
        $region53: #{tpu_custom_call.1} parent=47 // pred_check
          %p1464 = pneg %p196
        $region54: #{tpu_custom_call.1} parent=47 // pred_check_branch
          %1466 = sbr.rel (%p1464) target = $region56
        $region55: #{tpu_custom_call.1} parent=47 // pred_region
          %s1467 = smul.u32 8, %s26
          %1469 = vsyncadd %s1460, 0
          %s1470 = scalar_lea.hbm %s7, %s1467
          %s1472 = sshll.u32 %s1463, 4
          %s1473 = int_to_ptr.vmem [resolvable:$true] %s1472
          %s1474 = sshll.u32 %s1470, 4
          %s1475 = int_to_ptr.hbm [resolvable:$true] %s1474
          %1477 = dma.vmem_to_hbm [thread:$0]  %s1473, 128, %s1475, %s1460
        $region56: #{tpu_custom_call.1} parent=47 // pred_fallthru
          _
      $region48: #{tpu_custom_call.1} parent=5 // pred_fallthru
        _
      %p1478 = scmp.le.s32.totalorder 2, %s21
      // Predicated region
      $region57: #{tpu_custom_call.1} parent=5 // pred_check
        %p1479 = pneg %p1478
      $region58: #{tpu_custom_call.1} parent=5 // pred_check_branch
        %1481 = sbr.rel (%p1479) target = $region60
      $region59: #{tpu_custom_call.1} parent=5 // pred_region
        %s1482 = ssub.s32 %s21, 2
        // Predicated region
        $region61: #{tpu_custom_call.1} parent=59 // pred_check
          %p1483 = pneg %p202
        $region62: #{tpu_custom_call.1} parent=59 // pred_check_branch
          %1485 = sbr.rel (%p1483) target = $region64
        $region63: #{tpu_custom_call.1} parent=59 // pred_region
          %s1486 = sand.u32 %s187, 1
          %s1487 = scalar_lea.sflag [#allocation5], %s1486
          %s1488 = sand.u32 %s187, 1
          %s1489 = smul.addr %s1488, 8
          %s1490 = scalar_lea.vmem [#allocation6], %s1489
          %1492 = dma.done %s1487, 128
        $region64: #{tpu_custom_call.1} parent=59 // pred_fallthru
          _
      $region60: #{tpu_custom_call.1} parent=5 // pred_fallthru
        _
    $region6: #{tpu_custom_call.1} parent=1 // loop_footer
      %s25 = sadd.s32 1, %s21
    $region7: #{tpu_custom_call.1} parent=1 // loop_footer_branch
      %20 = sbr.rel target = $region3
    $region8: #{tpu_custom_call.1} parent=1 // loop_exit
      _
    %1493 = vsyncpa [#allocation4], 1
    %s1494 = scalar_lea.sflag [#allocation4], 1
    %1495 = vsyncpa %s1494, 1
    %1496 = vsyncpa [#allocation5], 1
    %s1497 = scalar_lea.sflag [#allocation5], 1
    %1498 = vsyncpa %s1497, 1

</llo_original>
